<compile_context>
chip_gen: v7x
topology: tpu7x:2x2x1
jax: 0.10.0
libtpu: 0.0.40
codegen_flags: <defaults>
</compile_context>

<pallas_src>
import functools

import jax
import jax.numpy as jnp
from jax.experimental import pallas as pl
from jax.experimental.pallas import tpu as pltpu


def _round_up(x, m):
    return ((x + m - 1) // m) * m


def _make_fm_dense_kernel(n_seg):
    """Build the fused FM-DENSE kernel for n_seg concatenated feature segments.

    Ref layout per grid step (one batch tile of TB rows):
      refs[0:n]      x_i   (TB, K_i)  feature segments (the concat, fused)
      refs[n:2n]     w1_i  (1,  K_i)  weight_w_first  split per segment
      refs[2n:3n]    b1_i  (1,  K_i)  weight_b_first  split per segment
      refs[3n:4n]    w2_i  (1,  K_i)  weight_w_second split per segment
      refs[4n:5n]    b2_i  (1,  K_i)  weight_b_second split per segment
      refs[5n]       out   (TB, 1)
    """

    def kernel(*refs):
        x_refs = refs[0:n_seg]
        w1_refs = refs[n_seg:2 * n_seg]
        b1_refs = refs[2 * n_seg:3 * n_seg]
        w2_refs = refs[3 * n_seg:4 * n_seg]
        b2_refs = refs[4 * n_seg:5 * n_seg]
        out_ref = refs[5 * n_seg]

        p1 = s2 = sq = None
        for i in range(n_seg):  # static unroll: concat@reduce == sum of partial reductions
            x = x_refs[i][...]                                   # (TB, K_i)
            f1 = x * w1_refs[i][...] + b1_refs[i][...]           # broadcast (1,K_i) row
            f2 = x * w2_refs[i][...] + b2_refs[i][...]
            t1 = jnp.sum(f1, axis=1, keepdims=True)              # (TB, 1)
            t2 = jnp.sum(f2, axis=1, keepdims=True)
            t3 = jnp.sum(f2 * f2, axis=1, keepdims=True)
            if p1 is None:
                p1, s2, sq = t1, t2, t3
            else:
                p1, s2, sq = p1 + t1, s2 + t2, sq + t3

        # fm_sum (DENSE): p = p1 + 0.5 * (sum(feat2)^2 - sum(feat2^2))
        out_ref[...] = p1 + 0.5 * (s2 * s2 - sq)

    return kernel


@functools.partial(jax.jit, static_argnames=("batch_tile",))
def _fm_block_dense(xs, w_first, b_first, w_second, b_second, *, batch_tile):
    """Fused FM (DENSE) over pre-concatenation feature segments xs (tuple of [B, K_i])."""
    assert batch_tile % 8 == 0
    n_seg = len(xs)
    widths = tuple(int(x.shape[1]) for x in xs)
    B = int(xs[0].shape[0])

    offs = [0]
    for w in widths:
        offs.append(offs[-1] + w)

    # Split the (1, K) weight vectors per segment (tiny static slices, done once per call).
    def split(v):
        return tuple(v[:, offs[i]:offs[i + 1]] for i in range(n_seg))

    w1s, b1s, w2s, b2s = split(w_first), split(b_first), split(w_second), split(b_second)

    # Batch tiling: TB rows per grid step, batch padded to a multiple of TB.
    TB = min(batch_tile, _round_up(B, 8))
    padded_B = _round_up(B, TB)
    if padded_B != B:
        xs = tuple(jnp.pad(x, ((0, padded_B - B), (0, 0))) for x in xs)
    grid = (padded_B // TB,)

    x_specs = [pl.BlockSpec((TB, w), lambda i: (i, 0)) for w in widths]
    w_specs = [pl.BlockSpec((1, w), lambda i: (0, 0)) for w in widths * 4]

    out = pl.pallas_call(
        _make_fm_dense_kernel(n_seg),
        out_shape=jax.ShapeDtypeStruct((padded_B, 1), jnp.float32),
        grid=grid,
        in_specs=x_specs + w_specs,
        out_specs=pl.BlockSpec((TB, 1), lambda i: (i, 0)),
        compiler_params=pltpu.CompilerParams(
            dimension_semantics=("parallel",)),  # shard batch tiles across TCs on v7x
    )(*xs, *w1s, *b1s, *w2s, *b2s)

    return out[:B]


def fm_block_forward(feat_dict, params, block_id, *, batch_tile=512):
    """FMBlock.forward, BlockType.DENSE path (feat_dense_id == [-1] for all dense blocks)."""
    # extract_dense_feat with [-1] => take full tensors, in block order
    dense_feats = [feat_dict["dense"][k] for k in sorted(feat_dict["dense"].keys())]
    # cat_feats: flatten sparse dict-of-dicts in (block, feat_id) order
    sparse_feats = []
    for blk in sorted(feat_dict["sparse"].keys()):
        for fid in sorted(feat_dict["sparse"][blk].keys()):
            sparse_feats.append(feat_dict["sparse"][blk][fid])
    xs = tuple(dense_feats + sparse_feats)  # the concat itself is fused inside the kernel

    p = _fm_block_dense(xs, params["w_first"], params["b_first"],
                        params["w_second"], params["b_second"], batch_tile=batch_tile)
    feat_dict["dense"][block_id] = p  # dim_config: feat_dim['dense'][block_id] = [1]
    return feat_dict


def init_fm_params(key, num_input_feat):
    """torch.nn.init.normal_ on all four 1-D parameter vectors (stored as (1, K) rows)."""
    kw1, kb1, kw2, kb2 = jax.random.split(key, 4)
    shape = (1, num_input_feat)
    return {
        "w_first": jax.random.normal(kw1, shape, jnp.float32),
        "b_first": jax.random.normal(kb1, shape, jnp.float32),
        "w_second": jax.random.normal(kw2, shape, jnp.float32),
        "b_second": jax.random.normal(kb2, shape, jnp.float32),
    }


if __name__ == "__main__":
    key = jax.random.PRNGKey(0)
    k_d0, k_d1, k_s0, k_s1, k_p = jax.random.split(key, 5)

    B = 256          # small demo batch; two grid steps with batch_tile=128
    D0, D1 = 13, 8   # dense feature widths from two upstream dense blocks
    E = 16           # sparse embedding dim, 2 sparse features in one upstream block
    block_id = 2

    feat_dict = {
        "dense": {
            0: jax.random.normal(k_d0, (B, D0), jnp.float32),
            1: jax.random.normal(k_d1, (B, D1), jnp.float32),
        },
        "sparse": {
            0: {
                0: jax.random.normal(k_s0, (B, E), jnp.float32),
                1: jax.random.normal(k_s1, (B, E), jnp.float32),
            },
        },
    }

    num_input_feat = D0 + D1 + 2 * E  # num_dense_feat + get_sparse_feat_dim_num(...)
    params = init_fm_params(k_p, num_input_feat)

    out_dict = fm_block_forward(feat_dict, params, block_id, batch_tile=128)
    p = jax.block_until_ready(out_dict["dense"][block_id])

    # pure-JAX reference (explicit concat, matching the torch forward)
    feat = jnp.concatenate(
        [feat_dict["dense"][0], feat_dict["dense"][1],
         feat_dict["sparse"][0][0], feat_dict["sparse"][0][1]], axis=1)
    feat1 = feat * params["w_first"] + params["b_first"]
    feat2 = feat * params["w_second"] + params["b_second"]
    p1 = jnp.sum(feat1, axis=1)
    sum_square = jnp.sum(feat2, axis=1) ** 2
    square_sum = jnp.sum(feat2 ** 2, axis=1)
    ref = (p1 + 0.5 * (sum_square - square_sum))[:, None]

    assert p.shape == (B, 1), p.shape
    assert bool(jnp.allclose(p, ref, rtol=2e-3, atol=5e-2)), "mismatch vs reference"
    print("KERNEL_OK")
</pallas_src>

<mosaic_0001>
module attributes {stable_mosaic.version = 11 : i64} {
  func.func @kernel(%arg0: i32, %arg1: memref<128x13xf32, #tpu.memory_space<vmem>>, %arg2: memref<128x8xf32, #tpu.memory_space<vmem>>, %arg3: memref<128x16xf32, #tpu.memory_space<vmem>>, %arg4: memref<128x16xf32, #tpu.memory_space<vmem>>, %arg5: memref<1x13xf32, #tpu.memory_space<vmem>>, %arg6: memref<1x8xf32, #tpu.memory_space<vmem>>, %arg7: memref<1x16xf32, #tpu.memory_space<vmem>>, %arg8: memref<1x16xf32, #tpu.memory_space<vmem>>, %arg9: memref<1x13xf32, #tpu.memory_space<vmem>>, %arg10: memref<1x8xf32, #tpu.memory_space<vmem>>, %arg11: memref<1x16xf32, #tpu.memory_space<vmem>>, %arg12: memref<1x16xf32, #tpu.memory_space<vmem>>, %arg13: memref<1x13xf32, #tpu.memory_space<vmem>>, %arg14: memref<1x8xf32, #tpu.memory_space<vmem>>, %arg15: memref<1x16xf32, #tpu.memory_space<vmem>>, %arg16: memref<1x16xf32, #tpu.memory_space<vmem>>, %arg17: memref<1x13xf32, #tpu.memory_space<vmem>>, %arg18: memref<1x8xf32, #tpu.memory_space<vmem>>, %arg19: memref<1x16xf32, #tpu.memory_space<vmem>>, %arg20: memref<1x16xf32, #tpu.memory_space<vmem>>, %arg21: memref<128x1xf32, #tpu.memory_space<vmem>>) attributes {dimension_semantics = [#tpu.dimension_semantics<parallel>], iteration_bounds = array<i64: 2>, scalar_prefetch = 0 : i64, scratch_operands = 0 : i64, tpu.core_type = #tpu.core_type<tc>, window_params = [{transform_indices = @transform_0, window_bounds = array<i64: 128, 13>}, {transform_indices = @transform_1, window_bounds = array<i64: 128, 8>}, {transform_indices = @transform_2, window_bounds = array<i64: 128, 16>}, {transform_indices = @transform_3, window_bounds = array<i64: 128, 16>}, {pipeline_mode = #tpu.pipeline_mode<synchronous>, transform_indices = @transform_4, window_bounds = array<i64: 1, 13>}, {pipeline_mode = #tpu.pipeline_mode<synchronous>, transform_indices = @transform_5, window_bounds = array<i64: 1, 8>}, {pipeline_mode = #tpu.pipeline_mode<synchronous>, transform_indices = @transform_6, window_bounds = array<i64: 1, 16>}, {pipeline_mode = #tpu.pipeline_mode<synchronous>, transform_indices = @transform_7, window_bounds = array<i64: 1, 16>}, {pipeline_mode = #tpu.pipeline_mode<synchronous>, transform_indices = @transform_8, window_bounds = array<i64: 1, 13>}, {pipeline_mode = #tpu.pipeline_mode<synchronous>, transform_indices = @transform_9, window_bounds = array<i64: 1, 8>}, {pipeline_mode = #tpu.pipeline_mode<synchronous>, transform_indices = @transform_10, window_bounds = array<i64: 1, 16>}, {pipeline_mode = #tpu.pipeline_mode<synchronous>, transform_indices = @transform_11, window_bounds = array<i64: 1, 16>}, {pipeline_mode = #tpu.pipeline_mode<synchronous>, transform_indices = @transform_12, window_bounds = array<i64: 1, 13>}, {pipeline_mode = #tpu.pipeline_mode<synchronous>, transform_indices = @transform_13, window_bounds = array<i64: 1, 8>}, {pipeline_mode = #tpu.pipeline_mode<synchronous>, transform_indices = @transform_14, window_bounds = array<i64: 1, 16>}, {pipeline_mode = #tpu.pipeline_mode<synchronous>, transform_indices = @transform_15, window_bounds = array<i64: 1, 16>}, {pipeline_mode = #tpu.pipeline_mode<synchronous>, transform_indices = @transform_16, window_bounds = array<i64: 1, 13>}, {pipeline_mode = #tpu.pipeline_mode<synchronous>, transform_indices = @transform_17, window_bounds = array<i64: 1, 8>}, {pipeline_mode = #tpu.pipeline_mode<synchronous>, transform_indices = @transform_18, window_bounds = array<i64: 1, 16>}, {pipeline_mode = #tpu.pipeline_mode<synchronous>, transform_indices = @transform_19, window_bounds = array<i64: 1, 16>}, {transform_indices = @transform_20, window_bounds = array<i64: 128, 1>}]} {
    %c0 = arith.constant 0 : index
    %c0_0 = arith.constant 0 : index
    %0 = vector.load %arg1[%c0, %c0_0] : memref<128x13xf32, #tpu.memory_space<vmem>>, vector<128x13xf32>
    %c0_1 = arith.constant 0 : index
    %c0_2 = arith.constant 0 : index
    %1 = vector.load %arg5[%c0_1, %c0_2] : memref<1x13xf32, #tpu.memory_space<vmem>>, vector<1x13xf32>
    %2 = vector.broadcast %1 : vector<1x13xf32> to vector<128x13xf32>
    %3 = arith.mulf %0, %2 : vector<128x13xf32>
    %c0_3 = arith.constant 0 : index
    %c0_4 = arith.constant 0 : index
    %4 = vector.load %arg9[%c0_3, %c0_4] : memref<1x13xf32, #tpu.memory_space<vmem>>, vector<1x13xf32>
    %5 = vector.broadcast %4 : vector<1x13xf32> to vector<128x13xf32>
    %6 = arith.addf %3, %5 : vector<128x13xf32>
    %c0_5 = arith.constant 0 : index
    %c0_6 = arith.constant 0 : index
    %7 = vector.load %arg13[%c0_5, %c0_6] : memref<1x13xf32, #tpu.memory_space<vmem>>, vector<1x13xf32>
    %8 = vector.broadcast %7 : vector<1x13xf32> to vector<128x13xf32>
    %9 = arith.mulf %0, %8 : vector<128x13xf32>
    %c0_7 = arith.constant 0 : index
    %c0_8 = arith.constant 0 : index
    %10 = vector.load %arg17[%c0_7, %c0_8] : memref<1x13xf32, #tpu.memory_space<vmem>>, vector<1x13xf32>
    %11 = vector.broadcast %10 : vector<1x13xf32> to vector<128x13xf32>
    %12 = arith.addf %9, %11 : vector<128x13xf32>
    %cst = arith.constant dense<0.000000e+00> : vector<128xf32>
    %13 = vector.multi_reduction <add>, %6, %cst [1] : vector<128x13xf32> to vector<128xf32>
    %14 = vector.shape_cast %13 : vector<128xf32> to vector<128x1xf32>
    %cst_9 = arith.constant dense<0.000000e+00> : vector<128xf32>
    %15 = vector.multi_reduction <add>, %12, %cst_9 [1] : vector<128x13xf32> to vector<128xf32>
    %16 = vector.shape_cast %15 : vector<128xf32> to vector<128x1xf32>
    %17 = arith.mulf %12, %12 : vector<128x13xf32>
    %cst_10 = arith.constant dense<0.000000e+00> : vector<128xf32>
    %18 = vector.multi_reduction <add>, %17, %cst_10 [1] : vector<128x13xf32> to vector<128xf32>
    %19 = vector.shape_cast %18 : vector<128xf32> to vector<128x1xf32>
    %c0_11 = arith.constant 0 : index
    %c0_12 = arith.constant 0 : index
    %20 = vector.load %arg2[%c0_11, %c0_12] : memref<128x8xf32, #tpu.memory_space<vmem>>, vector<128x8xf32>
    %c0_13 = arith.constant 0 : index
    %c0_14 = arith.constant 0 : index
    %21 = vector.load %arg6[%c0_13, %c0_14] : memref<1x8xf32, #tpu.memory_space<vmem>>, vector<1x8xf32>
    %22 = vector.broadcast %21 : vector<1x8xf32> to vector<128x8xf32>
    %23 = arith.mulf %20, %22 : vector<128x8xf32>
    %c0_15 = arith.constant 0 : index
    %c0_16 = arith.constant 0 : index
    %24 = vector.load %arg10[%c0_15, %c0_16] : memref<1x8xf32, #tpu.memory_space<vmem>>, vector<1x8xf32>
    %25 = vector.broadcast %24 : vector<1x8xf32> to vector<128x8xf32>
    %26 = arith.addf %23, %25 : vector<128x8xf32>
    %c0_17 = arith.constant 0 : index
    %c0_18 = arith.constant 0 : index
    %27 = vector.load %arg14[%c0_17, %c0_18] : memref<1x8xf32, #tpu.memory_space<vmem>>, vector<1x8xf32>
    %28 = vector.broadcast %27 : vector<1x8xf32> to vector<128x8xf32>
    %29 = arith.mulf %20, %28 : vector<128x8xf32>
    %c0_19 = arith.constant 0 : index
    %c0_20 = arith.constant 0 : index
    %30 = vector.load %arg18[%c0_19, %c0_20] : memref<1x8xf32, #tpu.memory_space<vmem>>, vector<1x8xf32>
    %31 = vector.broadcast %30 : vector<1x8xf32> to vector<128x8xf32>
    %32 = arith.addf %29, %31 : vector<128x8xf32>
    %cst_21 = arith.constant dense<0.000000e+00> : vector<128xf32>
    %33 = vector.multi_reduction <add>, %26, %cst_21 [1] : vector<128x8xf32> to vector<128xf32>
    %34 = vector.shape_cast %33 : vector<128xf32> to vector<128x1xf32>
    %cst_22 = arith.constant dense<0.000000e+00> : vector<128xf32>
    %35 = vector.multi_reduction <add>, %32, %cst_22 [1] : vector<128x8xf32> to vector<128xf32>
    %36 = vector.shape_cast %35 : vector<128xf32> to vector<128x1xf32>
    %37 = arith.mulf %32, %32 : vector<128x8xf32>
    %cst_23 = arith.constant dense<0.000000e+00> : vector<128xf32>
    %38 = vector.multi_reduction <add>, %37, %cst_23 [1] : vector<128x8xf32> to vector<128xf32>
    %39 = vector.shape_cast %38 : vector<128xf32> to vector<128x1xf32>
    %40 = arith.addf %14, %34 : vector<128x1xf32>
    %41 = arith.addf %16, %36 : vector<128x1xf32>
    %42 = arith.addf %19, %39 : vector<128x1xf32>
    %c0_24 = arith.constant 0 : index
    %c0_25 = arith.constant 0 : index
    %43 = vector.load %arg3[%c0_24, %c0_25] : memref<128x16xf32, #tpu.memory_space<vmem>>, vector<128x16xf32>
    %c0_26 = arith.constant 0 : index
    %c0_27 = arith.constant 0 : index
    %44 = vector.load %arg7[%c0_26, %c0_27] : memref<1x16xf32, #tpu.memory_space<vmem>>, vector<1x16xf32>
    %45 = vector.broadcast %44 : vector<1x16xf32> to vector<128x16xf32>
    %46 = arith.mulf %43, %45 : vector<128x16xf32>
    %c0_28 = arith.constant 0 : index
    %c0_29 = arith.constant 0 : index
    %47 = vector.load %arg11[%c0_28, %c0_29] : memref<1x16xf32, #tpu.memory_space<vmem>>, vector<1x16xf32>
    %48 = vector.broadcast %47 : vector<1x16xf32> to vector<128x16xf32>
    %49 = arith.addf %46, %48 : vector<128x16xf32>
    %c0_30 = arith.constant 0 : index
    %c0_31 = arith.constant 0 : index
    %50 = vector.load %arg15[%c0_30, %c0_31] : memref<1x16xf32, #tpu.memory_space<vmem>>, vector<1x16xf32>
    %51 = vector.broadcast %50 : vector<1x16xf32> to vector<128x16xf32>
    %52 = arith.mulf %43, %51 : vector<128x16xf32>
    %c0_32 = arith.constant 0 : index
    %c0_33 = arith.constant 0 : index
    %53 = vector.load %arg19[%c0_32, %c0_33] : memref<1x16xf32, #tpu.memory_space<vmem>>, vector<1x16xf32>
    %54 = vector.broadcast %53 : vector<1x16xf32> to vector<128x16xf32>
    %55 = arith.addf %52, %54 : vector<128x16xf32>
    %cst_34 = arith.constant dense<0.000000e+00> : vector<128xf32>
    %56 = vector.multi_reduction <add>, %49, %cst_34 [1] : vector<128x16xf32> to vector<128xf32>
    %57 = vector.shape_cast %56 : vector<128xf32> to vector<128x1xf32>
    %cst_35 = arith.constant dense<0.000000e+00> : vector<128xf32>
    %58 = vector.multi_reduction <add>, %55, %cst_35 [1] : vector<128x16xf32> to vector<128xf32>
    %59 = vector.shape_cast %58 : vector<128xf32> to vector<128x1xf32>
    %60 = arith.mulf %55, %55 : vector<128x16xf32>
    %cst_36 = arith.constant dense<0.000000e+00> : vector<128xf32>
    %61 = vector.multi_reduction <add>, %60, %cst_36 [1] : vector<128x16xf32> to vector<128xf32>
    %62 = vector.shape_cast %61 : vector<128xf32> to vector<128x1xf32>
    %63 = arith.addf %40, %57 : vector<128x1xf32>
    %64 = arith.addf %41, %59 : vector<128x1xf32>
    %65 = arith.addf %42, %62 : vector<128x1xf32>
    %c0_37 = arith.constant 0 : index
    %c0_38 = arith.constant 0 : index
    %66 = vector.load %arg4[%c0_37, %c0_38] : memref<128x16xf32, #tpu.memory_space<vmem>>, vector<128x16xf32>
    %c0_39 = arith.constant 0 : index
    %c0_40 = arith.constant 0 : index
    %67 = vector.load %arg8[%c0_39, %c0_40] : memref<1x16xf32, #tpu.memory_space<vmem>>, vector<1x16xf32>
    %68 = vector.broadcast %67 : vector<1x16xf32> to vector<128x16xf32>
    %69 = arith.mulf %66, %68 : vector<128x16xf32>
    %c0_41 = arith.constant 0 : index
    %c0_42 = arith.constant 0 : index
    %70 = vector.load %arg12[%c0_41, %c0_42] : memref<1x16xf32, #tpu.memory_space<vmem>>, vector<1x16xf32>
    %71 = vector.broadcast %70 : vector<1x16xf32> to vector<128x16xf32>
    %72 = arith.addf %69, %71 : vector<128x16xf32>
    %c0_43 = arith.constant 0 : index
    %c0_44 = arith.constant 0 : index
    %73 = vector.load %arg16[%c0_43, %c0_44] : memref<1x16xf32, #tpu.memory_space<vmem>>, vector<1x16xf32>
    %74 = vector.broadcast %73 : vector<1x16xf32> to vector<128x16xf32>
    %75 = arith.mulf %66, %74 : vector<128x16xf32>
    %c0_45 = arith.constant 0 : index
    %c0_46 = arith.constant 0 : index
    %76 = vector.load %arg20[%c0_45, %c0_46] : memref<1x16xf32, #tpu.memory_space<vmem>>, vector<1x16xf32>
    %77 = vector.broadcast %76 : vector<1x16xf32> to vector<128x16xf32>
    %78 = arith.addf %75, %77 : vector<128x16xf32>
    %cst_47 = arith.constant dense<0.000000e+00> : vector<128xf32>
    %79 = vector.multi_reduction <add>, %72, %cst_47 [1] : vector<128x16xf32> to vector<128xf32>
    %80 = vector.shape_cast %79 : vector<128xf32> to vector<128x1xf32>
    %cst_48 = arith.constant dense<0.000000e+00> : vector<128xf32>
    %81 = vector.multi_reduction <add>, %78, %cst_48 [1] : vector<128x16xf32> to vector<128xf32>
    %82 = vector.shape_cast %81 : vector<128xf32> to vector<128x1xf32>
    %83 = arith.mulf %78, %78 : vector<128x16xf32>
    %cst_49 = arith.constant dense<0.000000e+00> : vector<128xf32>
    %84 = vector.multi_reduction <add>, %83, %cst_49 [1] : vector<128x16xf32> to vector<128xf32>
    %85 = vector.shape_cast %84 : vector<128xf32> to vector<128x1xf32>
    %86 = arith.addf %63, %80 : vector<128x1xf32>
    %87 = arith.addf %64, %82 : vector<128x1xf32>
    %88 = arith.addf %65, %85 : vector<128x1xf32>
    %89 = arith.mulf %87, %87 : vector<128x1xf32>
    %90 = arith.subf %89, %88 : vector<128x1xf32>
    %cst_50 = arith.constant 5.000000e-01 : f32
    %91 = vector.broadcast %cst_50 : f32 to vector<128x1xf32>
    %92 = arith.mulf %91, %90 : vector<128x1xf32>
    %93 = arith.addf %86, %92 : vector<128x1xf32>
    %c0_51 = arith.constant 0 : index
    %c0_52 = arith.constant 0 : index
    %94 = vector.load %arg21[%c0_51, %c0_52] : memref<128x1xf32, #tpu.memory_space<vmem>>, vector<128x1xf32>
    tpu.vector_store %arg21[%c0_51, %c0_52], %93 {strides = array<i32>} : memref<128x1xf32, #tpu.memory_space<vmem>>, vector<128x1xf32>,
    return
  }
  func.func @transform_0(%arg0: i32) -> (i32, i32) {
    %c0_i32 = arith.constant 0 : i32
    %c0_i32_0 = arith.constant 0 : i32
    return %arg0, %c0_i32 : i32, i32
  }
  func.func @transform_1(%arg0: i32) -> (i32, i32) {
    %c0_i32 = arith.constant 0 : i32
    %c0_i32_0 = arith.constant 0 : i32
    return %arg0, %c0_i32 : i32, i32
  }
  func.func @transform_2(%arg0: i32) -> (i32, i32) {
    %c0_i32 = arith.constant 0 : i32
    %c0_i32_0 = arith.constant 0 : i32
    return %arg0, %c0_i32 : i32, i32
  }
  func.func @transform_3(%arg0: i32) -> (i32, i32) {
    %c0_i32 = arith.constant 0 : i32
    %c0_i32_0 = arith.constant 0 : i32
    return %arg0, %c0_i32 : i32, i32
  }
  func.func @transform_4(%arg0: i32) -> (i32, i32) {
    %c0_i32 = arith.constant 0 : i32
    %c0_i32_0 = arith.constant 0 : i32
    %c0_i32_1 = arith.constant 0 : i32
    return %c0_i32, %c0_i32_0 : i32, i32
  }
  func.func @transform_5(%arg0: i32) -> (i32, i32) {
    %c0_i32 = arith.constant 0 : i32
    %c0_i32_0 = arith.constant 0 : i32
    %c0_i32_1 = arith.constant 0 : i32
    return %c0_i32, %c0_i32_0 : i32, i32
  }
  func.func @transform_6(%arg0: i32) -> (i32, i32) {
    %c0_i32 = arith.constant 0 : i32
    %c0_i32_0 = arith.constant 0 : i32
    %c0_i32_1 = arith.constant 0 : i32
    return %c0_i32, %c0_i32_0 : i32, i32
  }
  func.func @transform_7(%arg0: i32) -> (i32, i32) {
    %c0_i32 = arith.constant 0 : i32
    %c0_i32_0 = arith.constant 0 : i32
    %c0_i32_1 = arith.constant 0 : i32
    return %c0_i32, %c0_i32_0 : i32, i32
  }
  func.func @transform_8(%arg0: i32) -> (i32, i32) {
    %c0_i32 = arith.constant 0 : i32
    %c0_i32_0 = arith.constant 0 : i32
    %c0_i32_1 = arith.constant 0 : i32
    return %c0_i32, %c0_i32_0 : i32, i32
  }
  func.func @transform_9(%arg0: i32) -> (i32, i32) {
    %c0_i32 = arith.constant 0 : i32
    %c0_i32_0 = arith.constant 0 : i32
    %c0_i32_1 = arith.constant 0 : i32
    return %c0_i32, %c0_i32_0 : i32, i32
  }
  func.func @transform_10(%arg0: i32) -> (i32, i32) {
    %c0_i32 = arith.constant 0 : i32
    %c0_i32_0 = arith.constant 0 : i32
    %c0_i32_1 = arith.constant 0 : i32
    return %c0_i32, %c0_i32_0 : i32, i32
  }
  func.func @transform_11(%arg0: i32) -> (i32, i32) {
    %c0_i32 = arith.constant 0 : i32
    %c0_i32_0 = arith.constant 0 : i32
    %c0_i32_1 = arith.constant 0 : i32
    return %c0_i32, %c0_i32_0 : i32, i32
  }
  func.func @transform_12(%arg0: i32) -> (i32, i32) {
    %c0_i32 = arith.constant 0 : i32
    %c0_i32_0 = arith.constant 0 : i32
    %c0_i32_1 = arith.constant 0 : i32
    return %c0_i32, %c0_i32_0 : i32, i32
  }
  func.func @transform_13(%arg0: i32) -> (i32, i32) {
    %c0_i32 = arith.constant 0 : i32
    %c0_i32_0 = arith.constant 0 : i32
    %c0_i32_1 = arith.constant 0 : i32
    return %c0_i32, %c0_i32_0 : i32, i32
  }
  func.func @transform_14(%arg0: i32) -> (i32, i32) {
    %c0_i32 = arith.constant 0 : i32
    %c0_i32_0 = arith.constant 0 : i32
    %c0_i32_1 = arith.constant 0 : i32
    return %c0_i32, %c0_i32_0 : i32, i32
  }
  func.func @transform_15(%arg0: i32) -> (i32, i32) {
    %c0_i32 = arith.constant 0 : i32
    %c0_i32_0 = arith.constant 0 : i32
    %c0_i32_1 = arith.constant 0 : i32
    return %c0_i32, %c0_i32_0 : i32, i32
  }
  func.func @transform_16(%arg0: i32) -> (i32, i32) {
    %c0_i32 = arith.constant 0 : i32
    %c0_i32_0 = arith.constant 0 : i32
    %c0_i32_1 = arith.constant 0 : i32
    return %c0_i32, %c0_i32_0 : i32, i32
  }
  func.func @transform_17(%arg0: i32) -> (i32, i32) {
    %c0_i32 = arith.constant 0 : i32
    %c0_i32_0 = arith.constant 0 : i32
    %c0_i32_1 = arith.constant 0 : i32
    return %c0_i32, %c0_i32_0 : i32, i32
  }
  func.func @transform_18(%arg0: i32) -> (i32, i32) {
    %c0_i32 = arith.constant 0 : i32
    %c0_i32_0 = arith.constant 0 : i32
    %c0_i32_1 = arith.constant 0 : i32
    return %c0_i32, %c0_i32_0 : i32, i32
  }
  func.func @transform_19(%arg0: i32) -> (i32, i32) {
    %c0_i32 = arith.constant 0 : i32
    %c0_i32_0 = arith.constant 0 : i32
    %c0_i32_1 = arith.constant 0 : i32
    return %c0_i32, %c0_i32_0 : i32, i32
  }
  func.func @transform_20(%arg0: i32) -> (i32, i32) {
    %c0_i32 = arith.constant 0 : i32
    %c0_i32_0 = arith.constant 0 : i32
    return %arg0, %c0_i32 : i32, i32
  }
}

</mosaic_0001>

<llo_original>
// kernel: _fm_block_dense.1
$region0: #{_fm_block_dense.1}
  #allocation0 [shape = 'u32[]', space=smem, size = 0x4, offset = 0x4, fixed_abs, tag = 'smem constant byte address 0x4 - core index']
  #allocation1 [shape = 'u32[144,128]{1,0:T(1,128)}', space=vmem, size = 0x12000, scoped, tag = 'internal scratch']
  %s0 = inlined_call_operand.vmem [shape: f32[256,13], index: 0, kind: input, shape index: {}]
  %s1 = inlined_call_operand.vmem [shape: f32[256,8], index: 1, kind: input, shape index: {}]
  %s2 = inlined_call_operand.vmem [shape: f32[256,16], index: 2, kind: input, shape index: {}]
  %s3 = inlined_call_operand.vmem [shape: f32[256,16], index: 3, kind: input, shape index: {}]
  %s4 = inlined_call_operand.vmem [shape: f32[1,13], index: 4, kind: input, shape index: {}]
  %s5 = inlined_call_operand.vmem [shape: f32[1,8], index: 5, kind: input, shape index: {}]
  %s6 = inlined_call_operand.vmem [shape: f32[1,16], index: 6, kind: input, shape index: {}]
  %s7 = inlined_call_operand.vmem [shape: f32[1,16], index: 7, kind: input, shape index: {}]
  %s8 = inlined_call_operand.vmem [shape: f32[1,13], index: 8, kind: input, shape index: {}]
  %s9 = inlined_call_operand.vmem [shape: f32[1,8], index: 9, kind: input, shape index: {}]
  %s10 = inlined_call_operand.vmem [shape: f32[1,16], index: 10, kind: input, shape index: {}]
  %s11 = inlined_call_operand.vmem [shape: f32[1,16], index: 11, kind: input, shape index: {}]
  %s12 = inlined_call_operand.vmem [shape: f32[1,13], index: 12, kind: input, shape index: {}]
  %s13 = inlined_call_operand.vmem [shape: f32[1,8], index: 13, kind: input, shape index: {}]
  %s14 = inlined_call_operand.vmem [shape: f32[1,16], index: 14, kind: input, shape index: {}]
  %s15 = inlined_call_operand.vmem [shape: f32[1,16], index: 15, kind: input, shape index: {}]
  %s16 = inlined_call_operand.vmem [shape: f32[1,13], index: 16, kind: input, shape index: {}]
  %s17 = inlined_call_operand.vmem [shape: f32[1,8], index: 17, kind: input, shape index: {}]
  %s18 = inlined_call_operand.vmem [shape: f32[1,16], index: 18, kind: input, shape index: {}]
  %s19 = inlined_call_operand.vmem [shape: f32[1,16], index: 19, kind: input, shape index: {}]
  %s20 = inlined_call_operand.vmem [shape: f32[256,1], index: 20, kind: output, shape index: {}]
  %s21 = sld [smem:[#allocation0]]
  $region113: #{_fm_block_dense.1} parent=0
    _
  %s23 = ssub.s32 1, %s21
  %s24 = scalar_select 0, %s23, %s21
  loop: start=0, step=1, limit=4
  $region2: #{_fm_block_dense.1} parent=0 // loop_pre_header
    _
  $region3: #{_fm_block_dense.1} parent=0 // loop_header
    %s26 = sphi 0, %s30
    %p27 = scmp.ge.s32.totalorder %s26, 4
    %s36 = sphi 0, %s38
    %s39 = sphi 0, %s36
    %s40 = sphi 0, %s39
    %s56 = sphi 0, %s40
    %s62 = sphi 0, %s64
    %s65 = sphi 0, %s62
    %s66 = sphi 0, %s65
    %s82 = sphi 0, %s66
    %s88 = sphi 0, %s90
    %s91 = sphi 0, %s88
    %s92 = sphi 0, %s91
    %s108 = sphi 0, %s92
    %s114 = sphi 0, %s116
    %s117 = sphi 0, %s114
    %s118 = sphi 0, %s117
    %s134 = sphi 0, %s118
    %s138 = sphi 0, %s138
    %s140 = sphi 0, %s138
    %s141 = sphi 0, %s140
    %s155 = sphi 0, %s141
    %s159 = sphi 0, %s159
    %s161 = sphi 0, %s159
    %s162 = sphi 0, %s161
    %s176 = sphi 0, %s162
    %s180 = sphi 0, %s180
    %s182 = sphi 0, %s180
    %s183 = sphi 0, %s182
    %s197 = sphi 0, %s183
    %s201 = sphi 0, %s201
    %s203 = sphi 0, %s201
    %s204 = sphi 0, %s203
    %s218 = sphi 0, %s204
    %s222 = sphi 0, %s222
    %s224 = sphi 0, %s222
    %s225 = sphi 0, %s224
    %s239 = sphi 0, %s225
    %s243 = sphi 0, %s243
    %s245 = sphi 0, %s243
    %s246 = sphi 0, %s245
    %s260 = sphi 0, %s246
    %s264 = sphi 0, %s264
    %s266 = sphi 0, %s264
    %s267 = sphi 0, %s266
    %s281 = sphi 0, %s267
    %s285 = sphi 0, %s285
    %s287 = sphi 0, %s285
    %s288 = sphi 0, %s287
    %s302 = sphi 0, %s288
    %s306 = sphi 0, %s306
    %s308 = sphi 0, %s306
    %s309 = sphi 0, %s308
    %s323 = sphi 0, %s309
    %s327 = sphi 0, %s327
    %s329 = sphi 0, %s327
    %s330 = sphi 0, %s329
    %s344 = sphi 0, %s330
    %s348 = sphi 0, %s348
    %s350 = sphi 0, %s348
    %s351 = sphi 0, %s350
    %s365 = sphi 0, %s351
    %s369 = sphi 0, %s369
    %s371 = sphi 0, %s369
    %s372 = sphi 0, %s371
    %s386 = sphi 0, %s372
    %s390 = sphi 0, %s390
    %s392 = sphi 0, %s390
    %s393 = sphi 0, %s392
    %s407 = sphi 0, %s393
    %s411 = sphi 0, %s411
    %s413 = sphi 0, %s411
    %s414 = sphi 0, %s413
    %s428 = sphi 0, %s414
    %s432 = sphi 0, %s432
    %s434 = sphi 0, %s432
    %s435 = sphi 0, %s434
    %s449 = sphi 0, %s435
    %s453 = sphi 0, %s453
    %s455 = sphi 0, %s453
    %s456 = sphi 0, %s455
    %s470 = sphi 0, %s456
    %s476 = sphi 0, %s478
    %s479 = sphi 0, %s476
    %s480 = sphi 0, %s479
    %s496 = sphi 0, %s480
  $region4: #{_fm_block_dense.1} parent=0 // loop_header_branch
    %29 = sbr.rel (%p27) target = $region8
  $region5: #{_fm_block_dense.1} parent=0 // loop_body
    %s31 = ssub.s32 %s26, 1
    %s32 = ssub.s32 %s26, 2
    %s33 = sadd.s32 %s26, 1
    %s34 = ssub.s32 %s26, %s33
    %p35 = scmp.eq.s32.totalorder %s34, 0
    %s37 = sadd.s32 %s36, 1
    %s38 = scalar_select %p35, %s36, %s37
    %p41 = pneg %p35
    %p42 = scmp.eq.s32.totalorder %s26, 1
    %p43 = por %p41, %p42
    %p44 = scmp.ne.s32.totalorder %s36, %s39
    %p45 = scmp.eq.s32.totalorder %s26, 0
    %p46 = por %p44, %p45
    %p47 = scmp.ne.s32.totalorder %s36, %s39
    %p48 = scmp.eq.s32.totalorder %s31, 1
    %p49 = por %p47, %p48
    %p50 = scmp.ne.s32.totalorder %s39, %s40
    %p51 = scmp.eq.s32.totalorder %s31, 0
    %p52 = por %p50, %p51
    %p53 = scmp.ne.s32.totalorder %s39, %s40
    %p54 = scmp.eq.s32.totalorder %s32, 1
    %p55 = por %p53, %p54
    %p57 = scmp.ne.s32.totalorder %s40, %s56
    %p58 = scmp.eq.s32.totalorder %s32, 0
    %p59 = por %p57, %p58
    %s60 = ssub.s32 %s26, %s33
    %p61 = scmp.eq.s32.totalorder %s60, 0
    %s63 = sadd.s32 %s62, 1
    %s64 = scalar_select %p61, %s62, %s63
    %p67 = pneg %p61
    %p68 = scmp.eq.s32.totalorder %s26, 1
    %p69 = por %p67, %p68
    %p70 = scmp.ne.s32.totalorder %s62, %s65
    %p71 = scmp.eq.s32.totalorder %s26, 0
    %p72 = por %p70, %p71
    %p73 = scmp.ne.s32.totalorder %s62, %s65
    %p74 = scmp.eq.s32.totalorder %s31, 1
    %p75 = por %p73, %p74
    %p76 = scmp.ne.s32.totalorder %s65, %s66
    %p77 = scmp.eq.s32.totalorder %s31, 0
    %p78 = por %p76, %p77
    %p79 = scmp.ne.s32.totalorder %s65, %s66
    %p80 = scmp.eq.s32.totalorder %s32, 1
    %p81 = por %p79, %p80
    %p83 = scmp.ne.s32.totalorder %s66, %s82
    %p84 = scmp.eq.s32.totalorder %s32, 0
    %p85 = por %p83, %p84
    %s86 = ssub.s32 %s26, %s33
    %p87 = scmp.eq.s32.totalorder %s86, 0
    %s89 = sadd.s32 %s88, 1
    %s90 = scalar_select %p87, %s88, %s89
    %p93 = pneg %p87
    %p94 = scmp.eq.s32.totalorder %s26, 1
    %p95 = por %p93, %p94
    %p96 = scmp.ne.s32.totalorder %s88, %s91
    %p97 = scmp.eq.s32.totalorder %s26, 0
    %p98 = por %p96, %p97
    %p99 = scmp.ne.s32.totalorder %s88, %s91
    %p100 = scmp.eq.s32.totalorder %s31, 1
    %p101 = por %p99, %p100
    %p102 = scmp.ne.s32.totalorder %s91, %s92
    %p103 = scmp.eq.s32.totalorder %s31, 0
    %p104 = por %p102, %p103
    %p105 = scmp.ne.s32.totalorder %s91, %s92
    %p106 = scmp.eq.s32.totalorder %s32, 1
    %p107 = por %p105, %p106
    %p109 = scmp.ne.s32.totalorder %s92, %s108
    %p110 = scmp.eq.s32.totalorder %s32, 0
    %p111 = por %p109, %p110
    %s112 = ssub.s32 %s26, %s33
    %p113 = scmp.eq.s32.totalorder %s112, 0
    %s115 = sadd.s32 %s114, 1
    %s116 = scalar_select %p113, %s114, %s115
    %p119 = pneg %p113
    %p120 = scmp.eq.s32.totalorder %s26, 1
    %p121 = por %p119, %p120
    %p122 = scmp.ne.s32.totalorder %s114, %s117
    %p123 = scmp.eq.s32.totalorder %s26, 0
    %p124 = por %p122, %p123
    %p125 = scmp.ne.s32.totalorder %s114, %s117
    %p126 = scmp.eq.s32.totalorder %s31, 1
    %p127 = por %p125, %p126
    %p128 = scmp.ne.s32.totalorder %s117, %s118
    %p129 = scmp.eq.s32.totalorder %s31, 0
    %p130 = por %p128, %p129
    %p131 = scmp.ne.s32.totalorder %s117, %s118
    %p132 = scmp.eq.s32.totalorder %s32, 1
    %p133 = por %p131, %p132
    %p135 = scmp.ne.s32.totalorder %s118, %s134
    %p136 = scmp.eq.s32.totalorder %s32, 0
    %p137 = por %p135, %p136
    %s139 = sadd.s32 %s138, 1
    %p142 = scmp.eq.s32.totalorder %s26, 1
    %p143 = scmp.ne.s32.totalorder %s138, %s140
    %p144 = scmp.eq.s32.totalorder %s26, 0
    %p145 = por %p143, %p144
    %p146 = scmp.ne.s32.totalorder %s138, %s140
    %p147 = scmp.eq.s32.totalorder %s31, 1
    %p148 = por %p146, %p147
    %p149 = scmp.ne.s32.totalorder %s140, %s141
    %p150 = scmp.eq.s32.totalorder %s31, 0
    %p151 = por %p149, %p150
    %p152 = scmp.ne.s32.totalorder %s140, %s141
    %p153 = scmp.eq.s32.totalorder %s32, 1
    %p154 = por %p152, %p153
    %p156 = scmp.ne.s32.totalorder %s141, %s155
    %p157 = scmp.eq.s32.totalorder %s32, 0
    %p158 = por %p156, %p157
    %s160 = sadd.s32 %s159, 1
    %p163 = scmp.eq.s32.totalorder %s26, 1
    %p164 = scmp.ne.s32.totalorder %s159, %s161
    %p165 = scmp.eq.s32.totalorder %s26, 0
    %p166 = por %p164, %p165
    %p167 = scmp.ne.s32.totalorder %s159, %s161
    %p168 = scmp.eq.s32.totalorder %s31, 1
    %p169 = por %p167, %p168
    %p170 = scmp.ne.s32.totalorder %s161, %s162
    %p171 = scmp.eq.s32.totalorder %s31, 0
    %p172 = por %p170, %p171
    %p173 = scmp.ne.s32.totalorder %s161, %s162
    %p174 = scmp.eq.s32.totalorder %s32, 1
    %p175 = por %p173, %p174
    %p177 = scmp.ne.s32.totalorder %s162, %s176
    %p178 = scmp.eq.s32.totalorder %s32, 0
    %p179 = por %p177, %p178
    %s181 = sadd.s32 %s180, 1
    %p184 = scmp.eq.s32.totalorder %s26, 1
    %p185 = scmp.ne.s32.totalorder %s180, %s182
    %p186 = scmp.eq.s32.totalorder %s26, 0
    %p187 = por %p185, %p186
    %p188 = scmp.ne.s32.totalorder %s180, %s182
    %p189 = scmp.eq.s32.totalorder %s31, 1
    %p190 = por %p188, %p189
    %p191 = scmp.ne.s32.totalorder %s182, %s183
    %p192 = scmp.eq.s32.totalorder %s31, 0
    %p193 = por %p191, %p192
    %p194 = scmp.ne.s32.totalorder %s182, %s183
    %p195 = scmp.eq.s32.totalorder %s32, 1
    %p196 = por %p194, %p195
    %p198 = scmp.ne.s32.totalorder %s183, %s197
    %p199 = scmp.eq.s32.totalorder %s32, 0
    %p200 = por %p198, %p199
    %s202 = sadd.s32 %s201, 1
    %p205 = scmp.eq.s32.totalorder %s26, 1
    %p206 = scmp.ne.s32.totalorder %s201, %s203
    %p207 = scmp.eq.s32.totalorder %s26, 0
    %p208 = por %p206, %p207
    %p209 = scmp.ne.s32.totalorder %s201, %s203
    %p210 = scmp.eq.s32.totalorder %s31, 1
    %p211 = por %p209, %p210
    %p212 = scmp.ne.s32.totalorder %s203, %s204
    %p213 = scmp.eq.s32.totalorder %s31, 0
    %p214 = por %p212, %p213
    %p215 = scmp.ne.s32.totalorder %s203, %s204
    %p216 = scmp.eq.s32.totalorder %s32, 1
    %p217 = por %p215, %p216
    %p219 = scmp.ne.s32.totalorder %s204, %s218
    %p220 = scmp.eq.s32.totalorder %s32, 0
    %p221 = por %p219, %p220
    %s223 = sadd.s32 %s222, 1
    %p226 = scmp.eq.s32.totalorder %s26, 1
    %p227 = scmp.ne.s32.totalorder %s222, %s224
    %p228 = scmp.eq.s32.totalorder %s26, 0
    %p229 = por %p227, %p228
    %p230 = scmp.ne.s32.totalorder %s222, %s224
    %p231 = scmp.eq.s32.totalorder %s31, 1
    %p232 = por %p230, %p231
    %p233 = scmp.ne.s32.totalorder %s224, %s225
    %p234 = scmp.eq.s32.totalorder %s31, 0
    %p235 = por %p233, %p234
    %p236 = scmp.ne.s32.totalorder %s224, %s225
    %p237 = scmp.eq.s32.totalorder %s32, 1
    %p238 = por %p236, %p237
    %p240 = scmp.ne.s32.totalorder %s225, %s239
    %p241 = scmp.eq.s32.totalorder %s32, 0
    %p242 = por %p240, %p241
    %s244 = sadd.s32 %s243, 1
    %p247 = scmp.eq.s32.totalorder %s26, 1
    %p248 = scmp.ne.s32.totalorder %s243, %s245
    %p249 = scmp.eq.s32.totalorder %s26, 0
    %p250 = por %p248, %p249
    %p251 = scmp.ne.s32.totalorder %s243, %s245
    %p252 = scmp.eq.s32.totalorder %s31, 1
    %p253 = por %p251, %p252
    %p254 = scmp.ne.s32.totalorder %s245, %s246
    %p255 = scmp.eq.s32.totalorder %s31, 0
    %p256 = por %p254, %p255
    %p257 = scmp.ne.s32.totalorder %s245, %s246
    %p258 = scmp.eq.s32.totalorder %s32, 1
    %p259 = por %p257, %p258
    %p261 = scmp.ne.s32.totalorder %s246, %s260
    %p262 = scmp.eq.s32.totalorder %s32, 0
    %p263 = por %p261, %p262
    %s265 = sadd.s32 %s264, 1
    %p268 = scmp.eq.s32.totalorder %s26, 1
    %p269 = scmp.ne.s32.totalorder %s264, %s266
    %p270 = scmp.eq.s32.totalorder %s26, 0
    %p271 = por %p269, %p270
    %p272 = scmp.ne.s32.totalorder %s264, %s266
    %p273 = scmp.eq.s32.totalorder %s31, 1
    %p274 = por %p272, %p273
    %p275 = scmp.ne.s32.totalorder %s266, %s267
    %p276 = scmp.eq.s32.totalorder %s31, 0
    %p277 = por %p275, %p276
    %p278 = scmp.ne.s32.totalorder %s266, %s267
    %p279 = scmp.eq.s32.totalorder %s32, 1
    %p280 = por %p278, %p279
    %p282 = scmp.ne.s32.totalorder %s267, %s281
    %p283 = scmp.eq.s32.totalorder %s32, 0
    %p284 = por %p282, %p283
    %s286 = sadd.s32 %s285, 1
    %p289 = scmp.eq.s32.totalorder %s26, 1
    %p290 = scmp.ne.s32.totalorder %s285, %s287
    %p291 = scmp.eq.s32.totalorder %s26, 0
    %p292 = por %p290, %p291
    %p293 = scmp.ne.s32.totalorder %s285, %s287
    %p294 = scmp.eq.s32.totalorder %s31, 1
    %p295 = por %p293, %p294
    %p296 = scmp.ne.s32.totalorder %s287, %s288
    %p297 = scmp.eq.s32.totalorder %s31, 0
    %p298 = por %p296, %p297
    %p299 = scmp.ne.s32.totalorder %s287, %s288
    %p300 = scmp.eq.s32.totalorder %s32, 1
    %p301 = por %p299, %p300
    %p303 = scmp.ne.s32.totalorder %s288, %s302
    %p304 = scmp.eq.s32.totalorder %s32, 0
    %p305 = por %p303, %p304
    %s307 = sadd.s32 %s306, 1
    %p310 = scmp.eq.s32.totalorder %s26, 1
    %p311 = scmp.ne.s32.totalorder %s306, %s308
    %p312 = scmp.eq.s32.totalorder %s26, 0
    %p313 = por %p311, %p312
    %p314 = scmp.ne.s32.totalorder %s306, %s308
    %p315 = scmp.eq.s32.totalorder %s31, 1
    %p316 = por %p314, %p315
    %p317 = scmp.ne.s32.totalorder %s308, %s309
    %p318 = scmp.eq.s32.totalorder %s31, 0
    %p319 = por %p317, %p318
    %p320 = scmp.ne.s32.totalorder %s308, %s309
    %p321 = scmp.eq.s32.totalorder %s32, 1
    %p322 = por %p320, %p321
    %p324 = scmp.ne.s32.totalorder %s309, %s323
    %p325 = scmp.eq.s32.totalorder %s32, 0
    %p326 = por %p324, %p325
    %s328 = sadd.s32 %s327, 1
    %p331 = scmp.eq.s32.totalorder %s26, 1
    %p332 = scmp.ne.s32.totalorder %s327, %s329
    %p333 = scmp.eq.s32.totalorder %s26, 0
    %p334 = por %p332, %p333
    %p335 = scmp.ne.s32.totalorder %s327, %s329
    %p336 = scmp.eq.s32.totalorder %s31, 1
    %p337 = por %p335, %p336
    %p338 = scmp.ne.s32.totalorder %s329, %s330
    %p339 = scmp.eq.s32.totalorder %s31, 0
    %p340 = por %p338, %p339
    %p341 = scmp.ne.s32.totalorder %s329, %s330
    %p342 = scmp.eq.s32.totalorder %s32, 1
    %p343 = por %p341, %p342
    %p345 = scmp.ne.s32.totalorder %s330, %s344
    %p346 = scmp.eq.s32.totalorder %s32, 0
    %p347 = por %p345, %p346
    %s349 = sadd.s32 %s348, 1
    %p352 = scmp.eq.s32.totalorder %s26, 1
    %p353 = scmp.ne.s32.totalorder %s348, %s350
    %p354 = scmp.eq.s32.totalorder %s26, 0
    %p355 = por %p353, %p354
    %p356 = scmp.ne.s32.totalorder %s348, %s350
    %p357 = scmp.eq.s32.totalorder %s31, 1
    %p358 = por %p356, %p357
    %p359 = scmp.ne.s32.totalorder %s350, %s351
    %p360 = scmp.eq.s32.totalorder %s31, 0
    %p361 = por %p359, %p360
    %p362 = scmp.ne.s32.totalorder %s350, %s351
    %p363 = scmp.eq.s32.totalorder %s32, 1
    %p364 = por %p362, %p363
    %p366 = scmp.ne.s32.totalorder %s351, %s365
    %p367 = scmp.eq.s32.totalorder %s32, 0
    %p368 = por %p366, %p367
    %s370 = sadd.s32 %s369, 1
    %p373 = scmp.eq.s32.totalorder %s26, 1
    %p374 = scmp.ne.s32.totalorder %s369, %s371
    %p375 = scmp.eq.s32.totalorder %s26, 0
    %p376 = por %p374, %p375
    %p377 = scmp.ne.s32.totalorder %s369, %s371
    %p378 = scmp.eq.s32.totalorder %s31, 1
    %p379 = por %p377, %p378
    %p380 = scmp.ne.s32.totalorder %s371, %s372
    %p381 = scmp.eq.s32.totalorder %s31, 0
    %p382 = por %p380, %p381
    %p383 = scmp.ne.s32.totalorder %s371, %s372
    %p384 = scmp.eq.s32.totalorder %s32, 1
    %p385 = por %p383, %p384
    %p387 = scmp.ne.s32.totalorder %s372, %s386
    %p388 = scmp.eq.s32.totalorder %s32, 0
    %p389 = por %p387, %p388
    %s391 = sadd.s32 %s390, 1
    %p394 = scmp.eq.s32.totalorder %s26, 1
    %p395 = scmp.ne.s32.totalorder %s390, %s392
    %p396 = scmp.eq.s32.totalorder %s26, 0
    %p397 = por %p395, %p396
    %p398 = scmp.ne.s32.totalorder %s390, %s392
    %p399 = scmp.eq.s32.totalorder %s31, 1
    %p400 = por %p398, %p399
    %p401 = scmp.ne.s32.totalorder %s392, %s393
    %p402 = scmp.eq.s32.totalorder %s31, 0
    %p403 = por %p401, %p402
    %p404 = scmp.ne.s32.totalorder %s392, %s393
    %p405 = scmp.eq.s32.totalorder %s32, 1
    %p406 = por %p404, %p405
    %p408 = scmp.ne.s32.totalorder %s393, %s407
    %p409 = scmp.eq.s32.totalorder %s32, 0
    %p410 = por %p408, %p409
    %s412 = sadd.s32 %s411, 1
    %p415 = scmp.eq.s32.totalorder %s26, 1
    %p416 = scmp.ne.s32.totalorder %s411, %s413
    %p417 = scmp.eq.s32.totalorder %s26, 0
    %p418 = por %p416, %p417
    %p419 = scmp.ne.s32.totalorder %s411, %s413
    %p420 = scmp.eq.s32.totalorder %s31, 1
    %p421 = por %p419, %p420
    %p422 = scmp.ne.s32.totalorder %s413, %s414
    %p423 = scmp.eq.s32.totalorder %s31, 0
    %p424 = por %p422, %p423
    %p425 = scmp.ne.s32.totalorder %s413, %s414
    %p426 = scmp.eq.s32.totalorder %s32, 1
    %p427 = por %p425, %p426
    %p429 = scmp.ne.s32.totalorder %s414, %s428
    %p430 = scmp.eq.s32.totalorder %s32, 0
    %p431 = por %p429, %p430
    %s433 = sadd.s32 %s432, 1
    %p436 = scmp.eq.s32.totalorder %s26, 1
    %p437 = scmp.ne.s32.totalorder %s432, %s434
    %p438 = scmp.eq.s32.totalorder %s26, 0
    %p439 = por %p437, %p438
    %p440 = scmp.ne.s32.totalorder %s432, %s434
    %p441 = scmp.eq.s32.totalorder %s31, 1
    %p442 = por %p440, %p441
    %p443 = scmp.ne.s32.totalorder %s434, %s435
    %p444 = scmp.eq.s32.totalorder %s31, 0
    %p445 = por %p443, %p444
    %p446 = scmp.ne.s32.totalorder %s434, %s435
    %p447 = scmp.eq.s32.totalorder %s32, 1
    %p448 = por %p446, %p447
    %p450 = scmp.ne.s32.totalorder %s435, %s449
    %p451 = scmp.eq.s32.totalorder %s32, 0
    %p452 = por %p450, %p451
    %s454 = sadd.s32 %s453, 1
    %p457 = scmp.eq.s32.totalorder %s26, 1
    %p458 = scmp.ne.s32.totalorder %s453, %s455
    %p459 = scmp.eq.s32.totalorder %s26, 0
    %p460 = por %p458, %p459
    %p461 = scmp.ne.s32.totalorder %s453, %s455
    %p462 = scmp.eq.s32.totalorder %s31, 1
    %p463 = por %p461, %p462
    %p464 = scmp.ne.s32.totalorder %s455, %s456
    %p465 = scmp.eq.s32.totalorder %s31, 0
    %p466 = por %p464, %p465
    %p467 = scmp.ne.s32.totalorder %s455, %s456
    %p468 = scmp.eq.s32.totalorder %s32, 1
    %p469 = por %p467, %p468
    %p471 = scmp.ne.s32.totalorder %s456, %s470
    %p472 = scmp.eq.s32.totalorder %s32, 0
    %p473 = por %p471, %p472
    %s474 = ssub.s32 %s26, %s33
    %p475 = scmp.eq.s32.totalorder %s474, 0
    %s477 = sadd.s32 %s476, 1
    %s478 = scalar_select %p475, %s476, %s477
    %p481 = pneg %p475
    %p482 = scmp.eq.s32.totalorder %s26, 1
    %p483 = por %p481, %p482
    %p484 = scmp.ne.s32.totalorder %s476, %s479
    %p485 = scmp.eq.s32.totalorder %s26, 0
    %p486 = por %p484, %p485
    %p487 = scmp.ne.s32.totalorder %s476, %s479
    %p488 = scmp.eq.s32.totalorder %s31, 1
    %p489 = por %p487, %p488
    %p490 = scmp.ne.s32.totalorder %s479, %s480
    %p491 = scmp.eq.s32.totalorder %s31, 0
    %p492 = por %p490, %p491
    %p493 = scmp.ne.s32.totalorder %s479, %s480
    %p494 = scmp.eq.s32.totalorder %s32, 1
    %p495 = por %p493, %p494
    %p497 = scmp.ne.s32.totalorder %s480, %s496
    %p498 = scmp.eq.s32.totalorder %s32, 0
    %p499 = por %p497, %p498
    %p500 = scmp.le.s32.totalorder 1, %s26
    %p501 = scmp.lt.s32.totalorder %s26, 3
    %p502 = pnand %p500, %p501
    %p503 = pneg %p502
    // Predicated region
    $region9: #{_fm_block_dense.1} parent=5 // pred_check
      _
    $region10: #{_fm_block_dense.1} parent=5 // pred_check_branch
      %505 = sbr.rel (%p502) target = $region12
    $region11: #{_fm_block_dense.1} parent=5 // pred_region
      %s506 = ssub.s32 %s26, 1
      // Predicated region
      $region13: #{_fm_block_dense.1} parent=11 // pred_check
        %p507 = pneg %p151
      $region14: #{_fm_block_dense.1} parent=11 // pred_check_branch
        %509 = sbr.rel (%p507) target = $region16
      $region15: #{_fm_block_dense.1} parent=11 // pred_region
        _
      $region16: #{_fm_block_dense.1} parent=11 // pred_fallthru
        _
      // Predicated region
      $region17: #{_fm_block_dense.1} parent=11 // pred_check
        %p510 = pneg %p172
      $region18: #{_fm_block_dense.1} parent=11 // pred_check_branch
        %512 = sbr.rel (%p510) target = $region20
      $region19: #{_fm_block_dense.1} parent=11 // pred_region
        _
      $region20: #{_fm_block_dense.1} parent=11 // pred_fallthru
        _
      // Predicated region
      $region21: #{_fm_block_dense.1} parent=11 // pred_check
        %p513 = pneg %p193
      $region22: #{_fm_block_dense.1} parent=11 // pred_check_branch
        %515 = sbr.rel (%p513) target = $region24
      $region23: #{_fm_block_dense.1} parent=11 // pred_region
        _
      $region24: #{_fm_block_dense.1} parent=11 // pred_fallthru
        _
      // Predicated region
      $region25: #{_fm_block_dense.1} parent=11 // pred_check
        %p516 = pneg %p214
      $region26: #{_fm_block_dense.1} parent=11 // pred_check_branch
        %518 = sbr.rel (%p516) target = $region28
      $region27: #{_fm_block_dense.1} parent=11 // pred_region
        _
      $region28: #{_fm_block_dense.1} parent=11 // pred_fallthru
        _
      // Predicated region
      $region29: #{_fm_block_dense.1} parent=11 // pred_check
        %p519 = pneg %p235
      $region30: #{_fm_block_dense.1} parent=11 // pred_check_branch
        %521 = sbr.rel (%p519) target = $region32
      $region31: #{_fm_block_dense.1} parent=11 // pred_region
        _
      $region32: #{_fm_block_dense.1} parent=11 // pred_fallthru
        _
      // Predicated region
      $region33: #{_fm_block_dense.1} parent=11 // pred_check
        %p522 = pneg %p256
      $region34: #{_fm_block_dense.1} parent=11 // pred_check_branch
        %524 = sbr.rel (%p522) target = $region36
      $region35: #{_fm_block_dense.1} parent=11 // pred_region
        _
      $region36: #{_fm_block_dense.1} parent=11 // pred_fallthru
        _
      // Predicated region
      $region37: #{_fm_block_dense.1} parent=11 // pred_check
        %p525 = pneg %p277
      $region38: #{_fm_block_dense.1} parent=11 // pred_check_branch
        %527 = sbr.rel (%p525) target = $region40
      $region39: #{_fm_block_dense.1} parent=11 // pred_region
        _
      $region40: #{_fm_block_dense.1} parent=11 // pred_fallthru
        _
      // Predicated region
      $region41: #{_fm_block_dense.1} parent=11 // pred_check
        %p528 = pneg %p298
      $region42: #{_fm_block_dense.1} parent=11 // pred_check_branch
        %530 = sbr.rel (%p528) target = $region44
      $region43: #{_fm_block_dense.1} parent=11 // pred_region
        _
      $region44: #{_fm_block_dense.1} parent=11 // pred_fallthru
        _
      // Predicated region
      $region45: #{_fm_block_dense.1} parent=11 // pred_check
        %p531 = pneg %p319
      $region46: #{_fm_block_dense.1} parent=11 // pred_check_branch
        %533 = sbr.rel (%p531) target = $region48
      $region47: #{_fm_block_dense.1} parent=11 // pred_region
        _
      $region48: #{_fm_block_dense.1} parent=11 // pred_fallthru
        _
      // Predicated region
      $region49: #{_fm_block_dense.1} parent=11 // pred_check
        %p534 = pneg %p340
      $region50: #{_fm_block_dense.1} parent=11 // pred_check_branch
        %536 = sbr.rel (%p534) target = $region52
      $region51: #{_fm_block_dense.1} parent=11 // pred_region
        _
      $region52: #{_fm_block_dense.1} parent=11 // pred_fallthru
        _
      // Predicated region
      $region53: #{_fm_block_dense.1} parent=11 // pred_check
        %p537 = pneg %p361
      $region54: #{_fm_block_dense.1} parent=11 // pred_check_branch
        %539 = sbr.rel (%p537) target = $region56
      $region55: #{_fm_block_dense.1} parent=11 // pred_region
        _
      $region56: #{_fm_block_dense.1} parent=11 // pred_fallthru
        _
      // Predicated region
      $region57: #{_fm_block_dense.1} parent=11 // pred_check
        %p540 = pneg %p382
      $region58: #{_fm_block_dense.1} parent=11 // pred_check_branch
        %542 = sbr.rel (%p540) target = $region60
      $region59: #{_fm_block_dense.1} parent=11 // pred_region
        _
      $region60: #{_fm_block_dense.1} parent=11 // pred_fallthru
        _
      // Predicated region
      $region61: #{_fm_block_dense.1} parent=11 // pred_check
        %p543 = pneg %p403
      $region62: #{_fm_block_dense.1} parent=11 // pred_check_branch
        %545 = sbr.rel (%p543) target = $region64
      $region63: #{_fm_block_dense.1} parent=11 // pred_region
        _
      $region64: #{_fm_block_dense.1} parent=11 // pred_fallthru
        _
      // Predicated region
      $region65: #{_fm_block_dense.1} parent=11 // pred_check
        %p546 = pneg %p424
      $region66: #{_fm_block_dense.1} parent=11 // pred_check_branch
        %548 = sbr.rel (%p546) target = $region68
      $region67: #{_fm_block_dense.1} parent=11 // pred_region
        _
      $region68: #{_fm_block_dense.1} parent=11 // pred_fallthru
        _
      // Predicated region
      $region69: #{_fm_block_dense.1} parent=11 // pred_check
        %p549 = pneg %p445
      $region70: #{_fm_block_dense.1} parent=11 // pred_check_branch
        %551 = sbr.rel (%p549) target = $region72
      $region71: #{_fm_block_dense.1} parent=11 // pred_region
        _
      $region72: #{_fm_block_dense.1} parent=11 // pred_fallthru
        _
      // Predicated region
      $region73: #{_fm_block_dense.1} parent=11 // pred_check
        %p552 = pneg %p466
      $region74: #{_fm_block_dense.1} parent=11 // pred_check_branch
        %554 = sbr.rel (%p552) target = $region76
      $region75: #{_fm_block_dense.1} parent=11 // pred_region
        _
      $region76: #{_fm_block_dense.1} parent=11 // pred_fallthru
        _
    $region12: #{_fm_block_dense.1} parent=5 // pred_fallthru
      _
    %p555 = scmp.lt.s32.totalorder %s26, 2
    // Predicated region
    $region77: #{_fm_block_dense.1} parent=5 // pred_check
      %p556 = pneg %p555
    $region78: #{_fm_block_dense.1} parent=5 // pred_check_branch
      %558 = sbr.rel (%p556) target = $region80
    $region79: #{_fm_block_dense.1} parent=5 // pred_region
      // Predicated region
      $region81: #{_fm_block_dense.1} parent=79 // pred_check
        %p559 = pneg %p46
      $region82: #{_fm_block_dense.1} parent=79 // pred_check_branch
        %561 = sbr.rel (%p559) target = $region84
      $region83: #{_fm_block_dense.1} parent=79 // pred_region
        %s562 = smul.u32 16, %s26
        %p563 = scmp.lt.s32.totalorder %s562, 31
        %s564 = scalar_select %p563, %s562, 31
        %s565 = smul.addr %s564, 8
        %s566 = scalar_lea.vmem %s0, %s565
        %s567 = smul.u32 16, %s26
      $region84: #{_fm_block_dense.1} parent=79 // pred_fallthru
        _
      // Predicated region
      $region85: #{_fm_block_dense.1} parent=79 // pred_check
        %p568 = pneg %p72
      $region86: #{_fm_block_dense.1} parent=79 // pred_check_branch
        %570 = sbr.rel (%p568) target = $region88
      $region87: #{_fm_block_dense.1} parent=79 // pred_region
        %s571 = smul.u32 16, %s26
        %p572 = scmp.lt.s32.totalorder %s571, 31
        %s573 = scalar_select %p572, %s571, 31
        %s574 = smul.addr %s573, 8
        %s575 = scalar_lea.vmem %s1, %s574
        %s576 = smul.u32 16, %s26
      $region88: #{_fm_block_dense.1} parent=79 // pred_fallthru
        _
      // Predicated region
      $region89: #{_fm_block_dense.1} parent=79 // pred_check
        %p577 = pneg %p98
      $region90: #{_fm_block_dense.1} parent=79 // pred_check_branch
        %579 = sbr.rel (%p577) target = $region92
      $region91: #{_fm_block_dense.1} parent=79 // pred_region
        %s580 = smul.u32 16, %s26
        %p581 = scmp.lt.s32.totalorder %s580, 31
        %s582 = scalar_select %p581, %s580, 31
        %s583 = smul.addr %s582, 8
        %s584 = scalar_lea.vmem %s2, %s583
        %s585 = smul.u32 16, %s26
      $region92: #{_fm_block_dense.1} parent=79 // pred_fallthru
        _
      // Predicated region
      $region93: #{_fm_block_dense.1} parent=79 // pred_check
        %p586 = pneg %p124
      $region94: #{_fm_block_dense.1} parent=79 // pred_check_branch
        %588 = sbr.rel (%p586) target = $region96
      $region95: #{_fm_block_dense.1} parent=79 // pred_region
        %s589 = smul.u32 16, %s26
        %p590 = scmp.lt.s32.totalorder %s589, 31
        %s591 = scalar_select %p590, %s589, 31
        %s592 = smul.addr %s591, 8
        %s593 = scalar_lea.vmem %s3, %s592
        %s594 = smul.u32 16, %s26
      $region96: #{_fm_block_dense.1} parent=79 // pred_fallthru
        _
    $region80: #{_fm_block_dense.1} parent=5 // pred_fallthru
      _
    %p595 = scmp.le.s32.totalorder 1, %s26
    %p596 = scmp.lt.s32.totalorder %s26, 3
    %p597 = pnand %p595, %p596
    %p598 = pneg %p597
    // Predicated region
    $region97: #{_fm_block_dense.1} parent=5 // pred_check
      _
    $region98: #{_fm_block_dense.1} parent=5 // pred_check_branch
      %600 = sbr.rel (%p597) target = $region100
    $region99: #{_fm_block_dense.1} parent=5 // pred_region
      %s601 = ssub.s32 %s26, 1
      %s602 = smul.u32 16, %s31
      %p603 = scmp.lt.s32.totalorder %s602, 31
      %s604 = scalar_select %p603, %s602, 31
      %s605 = smul.addr %s604, 8
      %s606 = scalar_lea.vmem %s0, %s605
      %p607 = pneg %p52
      %p608 = pneg %p49
      %s609 = smul.u32 16, %s31
      %p610 = scmp.lt.s32.totalorder %s609, 31
      %s611 = scalar_select %p610, %s609, 31
      %s612 = smul.addr %s611, 8
      %s613 = scalar_lea.vmem %s1, %s612
      %p614 = pneg %p78
      %p615 = pneg %p75
      %s616 = smul.u32 16, %s31
      %p617 = scmp.lt.s32.totalorder %s616, 31
      %s618 = scalar_select %p617, %s616, 31
      %s619 = smul.addr %s618, 8
      %s620 = scalar_lea.vmem %s2, %s619
      %p621 = pneg %p104
      %p622 = pneg %p101
      %s623 = smul.u32 16, %s31
      %p624 = scmp.lt.s32.totalorder %s623, 31
      %s625 = scalar_select %p624, %s623, 31
      %s626 = smul.addr %s625, 8
      %s627 = scalar_lea.vmem %s3, %s626
      %p628 = pneg %p130
      %p629 = pneg %p127
      %p630 = pneg %p151
      %p631 = pneg %p148
      %p632 = pneg %p172
      %p633 = pneg %p169
      %p634 = pneg %p193
      %p635 = pneg %p190
      %p636 = pneg %p214
      %p637 = pneg %p211
      %p638 = pneg %p235
      %p639 = pneg %p232
      %p640 = pneg %p256
      %p641 = pneg %p253
      %p642 = pneg %p277
      %p643 = pneg %p274
      %p644 = pneg %p298
      %p645 = pneg %p295
      %p646 = pneg %p319
      %p647 = pneg %p316
      %p648 = pneg %p340
      %p649 = pneg %p337
      %p650 = pneg %p361
      %p651 = pneg %p358
      %p652 = pneg %p382
      %p653 = pneg %p379
      %p654 = pneg %p403
      %p655 = pneg %p400
      %p656 = pneg %p424
      %p657 = pneg %p421
      %p658 = pneg %p445
      %p659 = pneg %p442
      %p660 = pneg %p466
      %p661 = pneg %p463
      %p662 = pneg %p492
      %p663 = pneg %p489
      %s664 = smul.u32 16, %s31
      %p665 = scmp.lt.s32.totalorder %s664, 31
      %s666 = scalar_select %p665, %s664, 31
      %s667 = smul.addr %s666, 8
      %s668 = scalar_lea.vmem %s20, %s667
      %s669 = smul.u32 16, %s31
      %p670 = scmp.lt.s32.totalorder %s669, 31
      %s671 = scalar_select %p670, %s669, 31
      %s672 = smul.addr %s671, 8
      %s673 = scalar_lea.vmem %s0, %s672
      %s674 = smul.u32 16, %s31
      %s675 = smul.u32 16, %s31
      %p676 = scmp.lt.s32.totalorder %s675, 31
      %s677 = scalar_select %p676, %s675, 31
      %s678 = smul.addr %s677, 8
      %s679 = scalar_lea.vmem %s1, %s678
      %s680 = smul.u32 16, %s31
      %s681 = smul.u32 16, %s31
      %p682 = scmp.lt.s32.totalorder %s681, 31
      %s683 = scalar_select %p682, %s681, 31
      %s684 = smul.addr %s683, 8
      %s685 = scalar_lea.vmem %s2, %s684
      %s686 = smul.u32 16, %s31
      %s687 = smul.u32 16, %s31
      %p688 = scmp.lt.s32.totalorder %s687, 31
      %s689 = scalar_select %p688, %s687, 31
      %s690 = smul.addr %s689, 8
      %s691 = scalar_lea.vmem %s3, %s690
      %s692 = smul.u32 16, %s31
      %s693 = smul.u32 16, %s31
      %p694 = scmp.lt.s32.totalorder %s693, 31
      %s695 = scalar_select %p694, %s693, 31
      %s696 = smul.addr %s695, 8
      %s697 = scalar_lea.vmem %s20, %s696
      %s698 = smul.u32 16, %s31
      %v699 = vld [vmem:[%s673] sm:$0xff]
      %v700 = vld [vmem:[%s673 + $0x8] sm:$0xff]
      %v701 = vld [vmem:[%s673 + $0x10] sm:$0xff]
      %v702 = vld [vmem:[%s673 + $0x18] sm:$0xff]
      %v703 = vld [vmem:[%s673 + $0x20] sm:$0xff]
      %v704 = vld [vmem:[%s673 + $0x28] sm:$0xff]
      %v705 = vld [vmem:[%s673 + $0x30] sm:$0xff]
      %v706 = vld [vmem:[%s673 + $0x38] sm:$0xff]
      %v707 = vld [vmem:[%s673 + $0x40] sm:$0xff]
      %v708 = vld [vmem:[%s673 + $0x48] sm:$0xff]
      %v709 = vld [vmem:[%s673 + $0x50] sm:$0xff]
      %v710 = vld [vmem:[%s673 + $0x58] sm:$0xff]
      %v711 = vld [vmem:[%s673 + $0x60] sm:$0xff]
      %v712 = vld [vmem:[%s673 + $0x68] sm:$0xff]
      %v713 = vld [vmem:[%s673 + $0x70] sm:$0xff]
      %v714 = vld [vmem:[%s673 + $0x78] sm:$0xff]
      %v715 = vld [vmem:[%s4] sm:$0x1]
      %v717 = vlaneseq
      %v718 = vshrl.u32 %v717, 7
      %v719 = vsub.s32 0, %v718
      %v720 = vrot.slane %v715, %v719
      %v722 = vmul.f32 %v699, %v720
      %v723 = vmul.f32 %v700, %v720
      %v724 = vmul.f32 %v701, %v720
      %v725 = vmul.f32 %v702, %v720
      %v726 = vmul.f32 %v703, %v720
      %v727 = vmul.f32 %v704, %v720
      %v728 = vmul.f32 %v705, %v720
      %v729 = vmul.f32 %v706, %v720
      %v730 = vmul.f32 %v707, %v720
      %v731 = vmul.f32 %v708, %v720
      %v732 = vmul.f32 %v709, %v720
      %v733 = vmul.f32 %v710, %v720
      %v734 = vmul.f32 %v711, %v720
      %v735 = vmul.f32 %v712, %v720
      %v736 = vmul.f32 %v713, %v720
      %v737 = vmul.f32 %v714, %v720
      %v738 = vld [vmem:[%s8] sm:$0x1]
      %v740 = vlaneseq
      %v741 = vshrl.u32 %v740, 7
      %v742 = vsub.s32 0, %v741
      %v743 = vrot.slane %v738, %v742
      %v745 = vadd.f32 %v722, %v743
      %v746 = vadd.f32 %v723, %v743
      %v747 = vadd.f32 %v724, %v743
      %v748 = vadd.f32 %v725, %v743
      %v749 = vadd.f32 %v726, %v743
      %v750 = vadd.f32 %v727, %v743
      %v751 = vadd.f32 %v728, %v743
      %v752 = vadd.f32 %v729, %v743
      %v753 = vadd.f32 %v730, %v743
      %v754 = vadd.f32 %v731, %v743
      %v755 = vadd.f32 %v732, %v743
      %v756 = vadd.f32 %v733, %v743
      %v757 = vadd.f32 %v734, %v743
      %v758 = vadd.f32 %v735, %v743
      %v759 = vadd.f32 %v736, %v743
      %v760 = vadd.f32 %v737, %v743
      %v761 = vld [vmem:[%s12] sm:$0x1]
      %v763 = vlaneseq
      %v764 = vshrl.u32 %v763, 7
      %v765 = vsub.s32 0, %v764
      %v766 = vrot.slane %v761, %v765
      %v768 = vmul.f32 %v699, %v766
      %v769 = vmul.f32 %v700, %v766
      %v770 = vmul.f32 %v701, %v766
      %v771 = vmul.f32 %v702, %v766
      %v772 = vmul.f32 %v703, %v766
      %v773 = vmul.f32 %v704, %v766
      %v774 = vmul.f32 %v705, %v766
      %v775 = vmul.f32 %v706, %v766
      %v776 = vmul.f32 %v707, %v766
      %v777 = vmul.f32 %v708, %v766
      %v778 = vmul.f32 %v709, %v766
      %v779 = vmul.f32 %v710, %v766
      %v780 = vmul.f32 %v711, %v766
      %v781 = vmul.f32 %v712, %v766
      %v782 = vmul.f32 %v713, %v766
      %v783 = vmul.f32 %v714, %v766
      %v784 = vld [vmem:[%s16] sm:$0x1]
      %v786 = vlaneseq
      %v787 = vshrl.u32 %v786, 7
      %v788 = vsub.s32 0, %v787
      %v789 = vrot.slane %v784, %v788
      %v791 = vadd.f32 %v768, %v789
      %v792 = vadd.f32 %v769, %v789
      %v793 = vadd.f32 %v770, %v789
      %v794 = vadd.f32 %v771, %v789
      %v795 = vadd.f32 %v772, %v789
      %v796 = vadd.f32 %v773, %v789
      %v797 = vadd.f32 %v774, %v789
      %v798 = vadd.f32 %v775, %v789
      %v799 = vadd.f32 %v776, %v789
      %v800 = vadd.f32 %v777, %v789
      %v801 = vadd.f32 %v778, %v789
      %v802 = vadd.f32 %v779, %v789
      %v803 = vadd.f32 %v780, %v789
      %v804 = vadd.f32 %v781, %v789
      %v805 = vadd.f32 %v782, %v789
      %v806 = vadd.f32 %v783, %v789
      %vm807 = vcmask 105472
      %v808 = vsel %vm807, %v745, 0.0
      %809 = vadd.xlane.f32.xlu0 %v808
      %v810 = vpop.xlane.xlu0 %809
      %v811 = vsel %vm807, %v746, 0.0
      %812 = vadd.xlane.f32.xlu0 %v811
      %v813 = vpop.xlane.xlu0 %812
      %v814 = vsel %vm807, %v747, 0.0
      %815 = vadd.xlane.f32.xlu0 %v814
      %v816 = vpop.xlane.xlu0 %815
      %v817 = vsel %vm807, %v748, 0.0
      %818 = vadd.xlane.f32.xlu0 %v817
      %v819 = vpop.xlane.xlu0 %818
      %v820 = vsel %vm807, %v749, 0.0
      %821 = vadd.xlane.f32.xlu0 %v820
      %v822 = vpop.xlane.xlu0 %821
      %v823 = vsel %vm807, %v750, 0.0
      %824 = vadd.xlane.f32.xlu0 %v823
      %v825 = vpop.xlane.xlu0 %824
      %v826 = vsel %vm807, %v751, 0.0
      %827 = vadd.xlane.f32.xlu0 %v826
      %v828 = vpop.xlane.xlu0 %827
      %v829 = vsel %vm807, %v752, 0.0
      %830 = vadd.xlane.f32.xlu0 %v829
      %v831 = vpop.xlane.xlu0 %830
      %v832 = vsel %vm807, %v753, 0.0
      %833 = vadd.xlane.f32.xlu0 %v832
      %v834 = vpop.xlane.xlu0 %833
      %v835 = vsel %vm807, %v754, 0.0
      %836 = vadd.xlane.f32.xlu0 %v835
      %v837 = vpop.xlane.xlu0 %836
      %v838 = vsel %vm807, %v755, 0.0
      %839 = vadd.xlane.f32.xlu0 %v838
      %v840 = vpop.xlane.xlu0 %839
      %v841 = vsel %vm807, %v756, 0.0
      %842 = vadd.xlane.f32.xlu0 %v841
      %v843 = vpop.xlane.xlu0 %842
      %v844 = vsel %vm807, %v757, 0.0
      %845 = vadd.xlane.f32.xlu0 %v844
      %v846 = vpop.xlane.xlu0 %845
      %v847 = vsel %vm807, %v758, 0.0
      %848 = vadd.xlane.f32.xlu0 %v847
      %v849 = vpop.xlane.xlu0 %848
      %v850 = vsel %vm807, %v759, 0.0
      %851 = vadd.xlane.f32.xlu0 %v850
      %v852 = vpop.xlane.xlu0 %851
      %v853 = vsel %vm807, %v760, 0.0
      %854 = vadd.xlane.f32.xlu0 %v853
      %v855 = vpop.xlane.xlu0 %854
      %v856 = vsel %vm807, %v791, 0.0
      %857 = vadd.xlane.f32.xlu0 %v856
      %v858 = vpop.xlane.xlu0 %857
      %v859 = vsel %vm807, %v792, 0.0
      %860 = vadd.xlane.f32.xlu0 %v859
      %v861 = vpop.xlane.xlu0 %860
      %v862 = vsel %vm807, %v793, 0.0
      %863 = vadd.xlane.f32.xlu0 %v862
      %v864 = vpop.xlane.xlu0 %863
      %v865 = vsel %vm807, %v794, 0.0
      %866 = vadd.xlane.f32.xlu0 %v865
      %v867 = vpop.xlane.xlu0 %866
      %v868 = vsel %vm807, %v795, 0.0
      %869 = vadd.xlane.f32.xlu0 %v868
      %v870 = vpop.xlane.xlu0 %869
      %v871 = vsel %vm807, %v796, 0.0
      %872 = vadd.xlane.f32.xlu0 %v871
      %v873 = vpop.xlane.xlu0 %872
      %v874 = vsel %vm807, %v797, 0.0
      %875 = vadd.xlane.f32.xlu0 %v874
      %v876 = vpop.xlane.xlu0 %875
      %v877 = vsel %vm807, %v798, 0.0
      %878 = vadd.xlane.f32.xlu0 %v877
      %v879 = vpop.xlane.xlu0 %878
      %v880 = vsel %vm807, %v799, 0.0
      %881 = vadd.xlane.f32.xlu0 %v880
      %v882 = vpop.xlane.xlu0 %881
      %v883 = vsel %vm807, %v800, 0.0
      %884 = vadd.xlane.f32.xlu0 %v883
      %v885 = vpop.xlane.xlu0 %884
      %v886 = vsel %vm807, %v801, 0.0
      %887 = vadd.xlane.f32.xlu0 %v886
      %v888 = vpop.xlane.xlu0 %887
      %v889 = vsel %vm807, %v802, 0.0
      %890 = vadd.xlane.f32.xlu0 %v889
      %v891 = vpop.xlane.xlu0 %890
      %v892 = vsel %vm807, %v803, 0.0
      %893 = vadd.xlane.f32.xlu0 %v892
      %v894 = vpop.xlane.xlu0 %893
      %v895 = vsel %vm807, %v804, 0.0
      %896 = vadd.xlane.f32.xlu0 %v895
      %v897 = vpop.xlane.xlu0 %896
      %v898 = vsel %vm807, %v805, 0.0
      %899 = vadd.xlane.f32.xlu0 %v898
      %v900 = vpop.xlane.xlu0 %899
      %v901 = vsel %vm807, %v806, 0.0
      %902 = vadd.xlane.f32.xlu0 %v901
      %v903 = vpop.xlane.xlu0 %902
      %v904 = vmul.f32 %v791, %v791
      %v905 = vmul.f32 %v792, %v792
      %v906 = vmul.f32 %v793, %v793
      %v907 = vmul.f32 %v794, %v794
      %v908 = vmul.f32 %v795, %v795
      %v909 = vmul.f32 %v796, %v796
      %v910 = vmul.f32 %v797, %v797
      %v911 = vmul.f32 %v798, %v798
      %v912 = vmul.f32 %v799, %v799
      %v913 = vmul.f32 %v800, %v800
      %v914 = vmul.f32 %v801, %v801
      %v915 = vmul.f32 %v802, %v802
      %v916 = vmul.f32 %v803, %v803
      %v917 = vmul.f32 %v804, %v804
      %v918 = vmul.f32 %v805, %v805
      %v919 = vmul.f32 %v806, %v806
      %v920 = vsel %vm807, %v904, 0.0
      %921 = vadd.xlane.f32.xlu0 %v920
      %v922 = vpop.xlane.xlu0 %921
      %v923 = vsel %vm807, %v905, 0.0
      %924 = vadd.xlane.f32.xlu0 %v923
      %v925 = vpop.xlane.xlu0 %924
      %v926 = vsel %vm807, %v906, 0.0
      %927 = vadd.xlane.f32.xlu0 %v926
      %v928 = vpop.xlane.xlu0 %927
      %v929 = vsel %vm807, %v907, 0.0
      %930 = vadd.xlane.f32.xlu0 %v929
      %v931 = vpop.xlane.xlu0 %930
      %v932 = vsel %vm807, %v908, 0.0
      %933 = vadd.xlane.f32.xlu0 %v932
      %v934 = vpop.xlane.xlu0 %933
      %v935 = vsel %vm807, %v909, 0.0
      %936 = vadd.xlane.f32.xlu0 %v935
      %v937 = vpop.xlane.xlu0 %936
      %v938 = vsel %vm807, %v910, 0.0
      %939 = vadd.xlane.f32.xlu0 %v938
      %v940 = vpop.xlane.xlu0 %939
      %v941 = vsel %vm807, %v911, 0.0
      %942 = vadd.xlane.f32.xlu0 %v941
      %v943 = vpop.xlane.xlu0 %942
      %v944 = vsel %vm807, %v912, 0.0
      %945 = vadd.xlane.f32.xlu0 %v944
      %v946 = vpop.xlane.xlu0 %945
      %v947 = vsel %vm807, %v913, 0.0
      %948 = vadd.xlane.f32.xlu0 %v947
      %v949 = vpop.xlane.xlu0 %948
      %v950 = vsel %vm807, %v914, 0.0
      %951 = vadd.xlane.f32.xlu0 %v950
      %v952 = vpop.xlane.xlu0 %951
      %v953 = vsel %vm807, %v915, 0.0
      %954 = vadd.xlane.f32.xlu0 %v953
      %v955 = vpop.xlane.xlu0 %954
      %v956 = vsel %vm807, %v916, 0.0
      %957 = vadd.xlane.f32.xlu0 %v956
      %v958 = vpop.xlane.xlu0 %957
      %v959 = vsel %vm807, %v917, 0.0
      %960 = vadd.xlane.f32.xlu0 %v959
      %v961 = vpop.xlane.xlu0 %960
      %v962 = vsel %vm807, %v918, 0.0
      %963 = vadd.xlane.f32.xlu0 %v962
      %v964 = vpop.xlane.xlu0 %963
      %v965 = vsel %vm807, %v919, 0.0
      %966 = vadd.xlane.f32.xlu0 %v965
      %v967 = vpop.xlane.xlu0 %966
      %v968 = vld [vmem:[%s679] sm:$0xff]
      %v969 = vld [vmem:[%s679 + $0x8] sm:$0xff]
      %v970 = vld [vmem:[%s679 + $0x10] sm:$0xff]
      %v971 = vld [vmem:[%s679 + $0x18] sm:$0xff]
      %v972 = vld [vmem:[%s679 + $0x20] sm:$0xff]
      %v973 = vld [vmem:[%s679 + $0x28] sm:$0xff]
      %v974 = vld [vmem:[%s679 + $0x30] sm:$0xff]
      %v975 = vld [vmem:[%s679 + $0x38] sm:$0xff]
      %v976 = vld [vmem:[%s679 + $0x40] sm:$0xff]
      %v977 = vld [vmem:[%s679 + $0x48] sm:$0xff]
      %v978 = vld [vmem:[%s679 + $0x50] sm:$0xff]
      %v979 = vld [vmem:[%s679 + $0x58] sm:$0xff]
      %v980 = vld [vmem:[%s679 + $0x60] sm:$0xff]
      %v981 = vld [vmem:[%s679 + $0x68] sm:$0xff]
      %v982 = vld [vmem:[%s679 + $0x70] sm:$0xff]
      %v983 = vld [vmem:[%s679 + $0x78] sm:$0xff]
      %v984 = vld [vmem:[%s5] sm:$0x1]
      %v986 = vlaneseq
      %v987 = vshrl.u32 %v986, 7
      %v988 = vsub.s32 0, %v987
      %v989 = vrot.slane %v984, %v988
      %v991 = vmul.f32 %v968, %v989
      %v992 = vmul.f32 %v969, %v989
      %v993 = vmul.f32 %v970, %v989
      %v994 = vmul.f32 %v971, %v989
      %v995 = vmul.f32 %v972, %v989
      %v996 = vmul.f32 %v973, %v989
      %v997 = vmul.f32 %v974, %v989
      %v998 = vmul.f32 %v975, %v989
      %v999 = vmul.f32 %v976, %v989
      %v1000 = vmul.f32 %v977, %v989
      %v1001 = vmul.f32 %v978, %v989
      %v1002 = vmul.f32 %v979, %v989
      %v1003 = vmul.f32 %v980, %v989
      %v1004 = vmul.f32 %v981, %v989
      %v1005 = vmul.f32 %v982, %v989
      %v1006 = vmul.f32 %v983, %v989
      %v1007 = vld [vmem:[%s9] sm:$0x1]
      %v1009 = vlaneseq
      %v1010 = vshrl.u32 %v1009, 7
      %v1011 = vsub.s32 0, %v1010
      %v1012 = vrot.slane %v1007, %v1011
      %v1014 = vadd.f32 %v991, %v1012
      %v1015 = vadd.f32 %v992, %v1012
      %v1016 = vadd.f32 %v993, %v1012
      %v1017 = vadd.f32 %v994, %v1012
      %v1018 = vadd.f32 %v995, %v1012
      %v1019 = vadd.f32 %v996, %v1012
      %v1020 = vadd.f32 %v997, %v1012
      %v1021 = vadd.f32 %v998, %v1012
      %v1022 = vadd.f32 %v999, %v1012
      %v1023 = vadd.f32 %v1000, %v1012
      %v1024 = vadd.f32 %v1001, %v1012
      %v1025 = vadd.f32 %v1002, %v1012
      %v1026 = vadd.f32 %v1003, %v1012
      %v1027 = vadd.f32 %v1004, %v1012
      %v1028 = vadd.f32 %v1005, %v1012
      %v1029 = vadd.f32 %v1006, %v1012
      %v1030 = vld [vmem:[%s13] sm:$0x1]
      %v1032 = vlaneseq
      %v1033 = vshrl.u32 %v1032, 7
      %v1034 = vsub.s32 0, %v1033
      %v1035 = vrot.slane %v1030, %v1034
      %v1037 = vmul.f32 %v968, %v1035
      %v1038 = vmul.f32 %v969, %v1035
      %v1039 = vmul.f32 %v970, %v1035
      %v1040 = vmul.f32 %v971, %v1035
      %v1041 = vmul.f32 %v972, %v1035
      %v1042 = vmul.f32 %v973, %v1035
      %v1043 = vmul.f32 %v974, %v1035
      %v1044 = vmul.f32 %v975, %v1035
      %v1045 = vmul.f32 %v976, %v1035
      %v1046 = vmul.f32 %v977, %v1035
      %v1047 = vmul.f32 %v978, %v1035
      %v1048 = vmul.f32 %v979, %v1035
      %v1049 = vmul.f32 %v980, %v1035
      %v1050 = vmul.f32 %v981, %v1035
      %v1051 = vmul.f32 %v982, %v1035
      %v1052 = vmul.f32 %v983, %v1035
      %v1053 = vld [vmem:[%s17] sm:$0x1]
      %v1055 = vlaneseq
      %v1056 = vshrl.u32 %v1055, 7
      %v1057 = vsub.s32 0, %v1056
      %v1058 = vrot.slane %v1053, %v1057
      %v1060 = vadd.f32 %v1037, %v1058
      %v1061 = vadd.f32 %v1038, %v1058
      %v1062 = vadd.f32 %v1039, %v1058
      %v1063 = vadd.f32 %v1040, %v1058
      %v1064 = vadd.f32 %v1041, %v1058
      %v1065 = vadd.f32 %v1042, %v1058
      %v1066 = vadd.f32 %v1043, %v1058
      %v1067 = vadd.f32 %v1044, %v1058
      %v1068 = vadd.f32 %v1045, %v1058
      %v1069 = vadd.f32 %v1046, %v1058
      %v1070 = vadd.f32 %v1047, %v1058
      %v1071 = vadd.f32 %v1048, %v1058
      %v1072 = vadd.f32 %v1049, %v1058
      %v1073 = vadd.f32 %v1050, %v1058
      %v1074 = vadd.f32 %v1051, %v1058
      %v1075 = vadd.f32 %v1052, %v1058
      %vm1076 = vcmask 64512
      %v1077 = vsel %vm1076, %v1014, 0.0
      %1078 = vadd.xlane.f32.xlu0 %v1077
      %v1079 = vpop.xlane.xlu0 %1078
      %v1080 = vsel %vm1076, %v1015, 0.0
      %1081 = vadd.xlane.f32.xlu0 %v1080
      %v1082 = vpop.xlane.xlu0 %1081
      %v1083 = vsel %vm1076, %v1016, 0.0
      %1084 = vadd.xlane.f32.xlu0 %v1083
      %v1085 = vpop.xlane.xlu0 %1084
      %v1086 = vsel %vm1076, %v1017, 0.0
      %1087 = vadd.xlane.f32.xlu0 %v1086
      %v1088 = vpop.xlane.xlu0 %1087
      %v1089 = vsel %vm1076, %v1018, 0.0
      %1090 = vadd.xlane.f32.xlu0 %v1089
      %v1091 = vpop.xlane.xlu0 %1090
      %v1092 = vsel %vm1076, %v1019, 0.0
      %1093 = vadd.xlane.f32.xlu0 %v1092
      %v1094 = vpop.xlane.xlu0 %1093
      %v1095 = vsel %vm1076, %v1020, 0.0
      %1096 = vadd.xlane.f32.xlu0 %v1095
      %v1097 = vpop.xlane.xlu0 %1096
      %v1098 = vsel %vm1076, %v1021, 0.0
      %1099 = vadd.xlane.f32.xlu0 %v1098
      %v1100 = vpop.xlane.xlu0 %1099
      %v1101 = vsel %vm1076, %v1022, 0.0
      %1102 = vadd.xlane.f32.xlu0 %v1101
      %v1103 = vpop.xlane.xlu0 %1102
      %v1104 = vsel %vm1076, %v1023, 0.0
      %1105 = vadd.xlane.f32.xlu0 %v1104
      %v1106 = vpop.xlane.xlu0 %1105
      %v1107 = vsel %vm1076, %v1024, 0.0
      %1108 = vadd.xlane.f32.xlu0 %v1107
      %v1109 = vpop.xlane.xlu0 %1108
      %v1110 = vsel %vm1076, %v1025, 0.0
      %1111 = vadd.xlane.f32.xlu0 %v1110
      %v1112 = vpop.xlane.xlu0 %1111
      %v1113 = vsel %vm1076, %v1026, 0.0
      %1114 = vadd.xlane.f32.xlu0 %v1113
      %v1115 = vpop.xlane.xlu0 %1114
      %v1116 = vsel %vm1076, %v1027, 0.0
      %1117 = vadd.xlane.f32.xlu0 %v1116
      %v1118 = vpop.xlane.xlu0 %1117
      %v1119 = vsel %vm1076, %v1028, 0.0
      %1120 = vadd.xlane.f32.xlu0 %v1119
      %v1121 = vpop.xlane.xlu0 %1120
      %v1122 = vsel %vm1076, %v1029, 0.0
      %1123 = vadd.xlane.f32.xlu0 %v1122
      %v1124 = vpop.xlane.xlu0 %1123
      %v1125 = vsel %vm1076, %v1060, 0.0
      %1126 = vadd.xlane.f32.xlu0 %v1125
      %v1127 = vpop.xlane.xlu0 %1126
      %v1128 = vsel %vm1076, %v1061, 0.0
      %1129 = vadd.xlane.f32.xlu0 %v1128
      %v1130 = vpop.xlane.xlu0 %1129
      %v1131 = vsel %vm1076, %v1062, 0.0
      %1132 = vadd.xlane.f32.xlu0 %v1131
      %v1133 = vpop.xlane.xlu0 %1132
      %v1134 = vsel %vm1076, %v1063, 0.0
      %1135 = vadd.xlane.f32.xlu0 %v1134
      %v1136 = vpop.xlane.xlu0 %1135
      %v1137 = vsel %vm1076, %v1064, 0.0
      %1138 = vadd.xlane.f32.xlu0 %v1137
      %v1139 = vpop.xlane.xlu0 %1138
      %v1140 = vsel %vm1076, %v1065, 0.0
      %1141 = vadd.xlane.f32.xlu0 %v1140
      %v1142 = vpop.xlane.xlu0 %1141
      %v1143 = vsel %vm1076, %v1066, 0.0
      %1144 = vadd.xlane.f32.xlu0 %v1143
      %v1145 = vpop.xlane.xlu0 %1144
      %v1146 = vsel %vm1076, %v1067, 0.0
      %1147 = vadd.xlane.f32.xlu0 %v1146
      %v1148 = vpop.xlane.xlu0 %1147
      %v1149 = vsel %vm1076, %v1068, 0.0
      %1150 = vadd.xlane.f32.xlu0 %v1149
      %v1151 = vpop.xlane.xlu0 %1150
      %v1152 = vsel %vm1076, %v1069, 0.0
      %1153 = vadd.xlane.f32.xlu0 %v1152
      %v1154 = vpop.xlane.xlu0 %1153
      %v1155 = vsel %vm1076, %v1070, 0.0
      %1156 = vadd.xlane.f32.xlu0 %v1155
      %v1157 = vpop.xlane.xlu0 %1156
      %v1158 = vsel %vm1076, %v1071, 0.0
      %1159 = vadd.xlane.f32.xlu0 %v1158
      %v1160 = vpop.xlane.xlu0 %1159
      %v1161 = vsel %vm1076, %v1072, 0.0
      %1162 = vadd.xlane.f32.xlu0 %v1161
      %v1163 = vpop.xlane.xlu0 %1162
      %v1164 = vsel %vm1076, %v1073, 0.0
      %1165 = vadd.xlane.f32.xlu0 %v1164
      %v1166 = vpop.xlane.xlu0 %1165
      %v1167 = vsel %vm1076, %v1074, 0.0
      %1168 = vadd.xlane.f32.xlu0 %v1167
      %v1169 = vpop.xlane.xlu0 %1168
      %v1170 = vsel %vm1076, %v1075, 0.0
      %1171 = vadd.xlane.f32.xlu0 %v1170
      %v1172 = vpop.xlane.xlu0 %1171
      %v1173 = vmul.f32 %v1060, %v1060
      %v1174 = vmul.f32 %v1061, %v1061
      %v1175 = vmul.f32 %v1062, %v1062
      %v1176 = vmul.f32 %v1063, %v1063
      %v1177 = vmul.f32 %v1064, %v1064
      %v1178 = vmul.f32 %v1065, %v1065
      %v1179 = vmul.f32 %v1066, %v1066
      %v1180 = vmul.f32 %v1067, %v1067
      %v1181 = vmul.f32 %v1068, %v1068
      %v1182 = vmul.f32 %v1069, %v1069
      %v1183 = vmul.f32 %v1070, %v1070
      %v1184 = vmul.f32 %v1071, %v1071
      %v1185 = vmul.f32 %v1072, %v1072
      %v1186 = vmul.f32 %v1073, %v1073
      %v1187 = vmul.f32 %v1074, %v1074
      %v1188 = vmul.f32 %v1075, %v1075
      %v1189 = vsel %vm1076, %v1173, 0.0
      %1190 = vadd.xlane.f32.xlu0 %v1189
      %v1191 = vpop.xlane.xlu0 %1190
      %v1192 = vsel %vm1076, %v1174, 0.0
      %1193 = vadd.xlane.f32.xlu0 %v1192
      %v1194 = vpop.xlane.xlu0 %1193
      %v1195 = vsel %vm1076, %v1175, 0.0
      %1196 = vadd.xlane.f32.xlu0 %v1195
      %v1197 = vpop.xlane.xlu0 %1196
      %v1198 = vsel %vm1076, %v1176, 0.0
      %1199 = vadd.xlane.f32.xlu0 %v1198
      %v1200 = vpop.xlane.xlu0 %1199
      %v1201 = vsel %vm1076, %v1177, 0.0
      %1202 = vadd.xlane.f32.xlu0 %v1201
      %v1203 = vpop.xlane.xlu0 %1202
      %v1204 = vsel %vm1076, %v1178, 0.0
      %1205 = vadd.xlane.f32.xlu0 %v1204
      %v1206 = vpop.xlane.xlu0 %1205
      %v1207 = vsel %vm1076, %v1179, 0.0
      %1208 = vadd.xlane.f32.xlu0 %v1207
      %v1209 = vpop.xlane.xlu0 %1208
      %v1210 = vsel %vm1076, %v1180, 0.0
      %1211 = vadd.xlane.f32.xlu0 %v1210
      %v1212 = vpop.xlane.xlu0 %1211
      %v1213 = vsel %vm1076, %v1181, 0.0
      %1214 = vadd.xlane.f32.xlu0 %v1213
      %v1215 = vpop.xlane.xlu0 %1214
      %v1216 = vsel %vm1076, %v1182, 0.0
      %1217 = vadd.xlane.f32.xlu0 %v1216
      %v1218 = vpop.xlane.xlu0 %1217
      %v1219 = vsel %vm1076, %v1183, 0.0
      %1220 = vadd.xlane.f32.xlu0 %v1219
      %v1221 = vpop.xlane.xlu0 %1220
      %v1222 = vsel %vm1076, %v1184, 0.0
      %1223 = vadd.xlane.f32.xlu0 %v1222
      %v1224 = vpop.xlane.xlu0 %1223
      %v1225 = vsel %vm1076, %v1185, 0.0
      %1226 = vadd.xlane.f32.xlu0 %v1225
      %v1227 = vpop.xlane.xlu0 %1226
      %v1228 = vsel %vm1076, %v1186, 0.0
      %1229 = vadd.xlane.f32.xlu0 %v1228
      %v1230 = vpop.xlane.xlu0 %1229
      %v1231 = vsel %vm1076, %v1187, 0.0
      %1232 = vadd.xlane.f32.xlu0 %v1231
      %v1233 = vpop.xlane.xlu0 %1232
      %v1234 = vsel %vm1076, %v1188, 0.0
      %1235 = vadd.xlane.f32.xlu0 %v1234
      %v1236 = vpop.xlane.xlu0 %1235
      %v1237 = vadd.f32 %v810, %v1079
      %v1238 = vadd.f32 %v813, %v1082
      %v1239 = vadd.f32 %v816, %v1085
      %v1240 = vadd.f32 %v819, %v1088
      %v1241 = vadd.f32 %v822, %v1091
      %v1242 = vadd.f32 %v825, %v1094
      %v1243 = vadd.f32 %v828, %v1097
      %v1244 = vadd.f32 %v831, %v1100
      %v1245 = vadd.f32 %v834, %v1103
      %v1246 = vadd.f32 %v837, %v1106
      %v1247 = vadd.f32 %v840, %v1109
      %v1248 = vadd.f32 %v843, %v1112
      %v1249 = vadd.f32 %v846, %v1115
      %v1250 = vadd.f32 %v849, %v1118
      %v1251 = vadd.f32 %v852, %v1121
      %v1252 = vadd.f32 %v855, %v1124
      %v1253 = vadd.f32 %v858, %v1127
      %v1254 = vadd.f32 %v861, %v1130
      %v1255 = vadd.f32 %v864, %v1133
      %v1256 = vadd.f32 %v867, %v1136
      %v1257 = vadd.f32 %v870, %v1139
      %v1258 = vadd.f32 %v873, %v1142
      %v1259 = vadd.f32 %v876, %v1145
      %v1260 = vadd.f32 %v879, %v1148
      %v1261 = vadd.f32 %v882, %v1151
      %v1262 = vadd.f32 %v885, %v1154
      %v1263 = vadd.f32 %v888, %v1157
      %v1264 = vadd.f32 %v891, %v1160
      %v1265 = vadd.f32 %v894, %v1163
      %v1266 = vadd.f32 %v897, %v1166
      %v1267 = vadd.f32 %v900, %v1169
      %v1268 = vadd.f32 %v903, %v1172
      %v1269 = vadd.f32 %v922, %v1191
      %v1270 = vadd.f32 %v925, %v1194
      %v1271 = vadd.f32 %v928, %v1197
      %v1272 = vadd.f32 %v931, %v1200
      %v1273 = vadd.f32 %v934, %v1203
      %v1274 = vadd.f32 %v937, %v1206
      %v1275 = vadd.f32 %v940, %v1209
      %v1276 = vadd.f32 %v943, %v1212
      %v1277 = vadd.f32 %v946, %v1215
      %v1278 = vadd.f32 %v949, %v1218
      %v1279 = vadd.f32 %v952, %v1221
      %v1280 = vadd.f32 %v955, %v1224
      %v1281 = vadd.f32 %v958, %v1227
      %v1282 = vadd.f32 %v961, %v1230
      %v1283 = vadd.f32 %v964, %v1233
      %v1284 = vadd.f32 %v967, %v1236
      %v1285 = vld [vmem:[%s685] sm:$0xff]
      %v1286 = vld [vmem:[%s685 + $0x8] sm:$0xff]
      %v1287 = vld [vmem:[%s685 + $0x10] sm:$0xff]
      %v1288 = vld [vmem:[%s685 + $0x18] sm:$0xff]
      %v1289 = vld [vmem:[%s685 + $0x20] sm:$0xff]
      %v1290 = vld [vmem:[%s685 + $0x28] sm:$0xff]
      %v1291 = vld [vmem:[%s685 + $0x30] sm:$0xff]
      %v1292 = vld [vmem:[%s685 + $0x38] sm:$0xff]
      %v1293 = vld [vmem:[%s685 + $0x40] sm:$0xff]
      %v1294 = vld [vmem:[%s685 + $0x48] sm:$0xff]
      %v1295 = vld [vmem:[%s685 + $0x50] sm:$0xff]
      %v1296 = vld [vmem:[%s685 + $0x58] sm:$0xff]
      %v1297 = vld [vmem:[%s685 + $0x60] sm:$0xff]
      %v1298 = vld [vmem:[%s685 + $0x68] sm:$0xff]
      %v1299 = vld [vmem:[%s685 + $0x70] sm:$0xff]
      %v1300 = vld [vmem:[%s685 + $0x78] sm:$0xff]
      %v1301 = vld [vmem:[%s6] sm:$0x1]
      %v1303 = vlaneseq
      %v1304 = vshrl.u32 %v1303, 7
      %v1305 = vsub.s32 0, %v1304
      %v1306 = vrot.slane %v1301, %v1305
      %v1308 = vmul.f32 %v1285, %v1306
      %v1309 = vmul.f32 %v1286, %v1306
      %v1310 = vmul.f32 %v1287, %v1306
      %v1311 = vmul.f32 %v1288, %v1306
      %v1312 = vmul.f32 %v1289, %v1306
      %v1313 = vmul.f32 %v1290, %v1306
      %v1314 = vmul.f32 %v1291, %v1306
      %v1315 = vmul.f32 %v1292, %v1306
      %v1316 = vmul.f32 %v1293, %v1306
      %v1317 = vmul.f32 %v1294, %v1306
      %v1318 = vmul.f32 %v1295, %v1306
      %v1319 = vmul.f32 %v1296, %v1306
      %v1320 = vmul.f32 %v1297, %v1306
      %v1321 = vmul.f32 %v1298, %v1306
      %v1322 = vmul.f32 %v1299, %v1306
      %v1323 = vmul.f32 %v1300, %v1306
      %v1324 = vld [vmem:[%s10] sm:$0x1]
      %v1326 = vlaneseq
      %v1327 = vshrl.u32 %v1326, 7
      %v1328 = vsub.s32 0, %v1327
      %v1329 = vrot.slane %v1324, %v1328
      %v1331 = vadd.f32 %v1308, %v1329
      %v1332 = vadd.f32 %v1309, %v1329
      %v1333 = vadd.f32 %v1310, %v1329
      %v1334 = vadd.f32 %v1311, %v1329
      %v1335 = vadd.f32 %v1312, %v1329
      %v1336 = vadd.f32 %v1313, %v1329
      %v1337 = vadd.f32 %v1314, %v1329
      %v1338 = vadd.f32 %v1315, %v1329
      %v1339 = vadd.f32 %v1316, %v1329
      %v1340 = vadd.f32 %v1317, %v1329
      %v1341 = vadd.f32 %v1318, %v1329
      %v1342 = vadd.f32 %v1319, %v1329
      %v1343 = vadd.f32 %v1320, %v1329
      %v1344 = vadd.f32 %v1321, %v1329
      %v1345 = vadd.f32 %v1322, %v1329
      %v1346 = vadd.f32 %v1323, %v1329
      %v1347 = vld [vmem:[%s14] sm:$0x1]
      %v1349 = vlaneseq
      %v1350 = vshrl.u32 %v1349, 7
      %v1351 = vsub.s32 0, %v1350
      %v1352 = vrot.slane %v1347, %v1351
      %v1354 = vmul.f32 %v1285, %v1352
      %v1355 = vmul.f32 %v1286, %v1352
      %v1356 = vmul.f32 %v1287, %v1352
      %v1357 = vmul.f32 %v1288, %v1352
      %v1358 = vmul.f32 %v1289, %v1352
      %v1359 = vmul.f32 %v1290, %v1352
      %v1360 = vmul.f32 %v1291, %v1352
      %v1361 = vmul.f32 %v1292, %v1352
      %v1362 = vmul.f32 %v1293, %v1352
      %v1363 = vmul.f32 %v1294, %v1352
      %v1364 = vmul.f32 %v1295, %v1352
      %v1365 = vmul.f32 %v1296, %v1352
      %v1366 = vmul.f32 %v1297, %v1352
      %v1367 = vmul.f32 %v1298, %v1352
      %v1368 = vmul.f32 %v1299, %v1352
      %v1369 = vmul.f32 %v1300, %v1352
      %v1370 = vld [vmem:[%s18] sm:$0x1]
      %v1372 = vlaneseq
      %v1373 = vshrl.u32 %v1372, 7
      %v1374 = vsub.s32 0, %v1373
      %v1375 = vrot.slane %v1370, %v1374
      %v1377 = vadd.f32 %v1354, %v1375
      %v1378 = vadd.f32 %v1355, %v1375
      %v1379 = vadd.f32 %v1356, %v1375
      %v1380 = vadd.f32 %v1357, %v1375
      %v1381 = vadd.f32 %v1358, %v1375
      %v1382 = vadd.f32 %v1359, %v1375
      %v1383 = vadd.f32 %v1360, %v1375
      %v1384 = vadd.f32 %v1361, %v1375
      %v1385 = vadd.f32 %v1362, %v1375
      %v1386 = vadd.f32 %v1363, %v1375
      %v1387 = vadd.f32 %v1364, %v1375
      %v1388 = vadd.f32 %v1365, %v1375
      %v1389 = vadd.f32 %v1366, %v1375
      %v1390 = vadd.f32 %v1367, %v1375
      %v1391 = vadd.f32 %v1368, %v1375
      %v1392 = vadd.f32 %v1369, %v1375
      %vm1393 = vcmask 130048
      %v1394 = vsel %vm1393, %v1331, 0.0
      %1395 = vadd.xlane.f32.xlu0 %v1394
      %v1396 = vpop.xlane.xlu0 %1395
      %v1397 = vsel %vm1393, %v1332, 0.0
      %1398 = vadd.xlane.f32.xlu0 %v1397
      %v1399 = vpop.xlane.xlu0 %1398
      %v1400 = vsel %vm1393, %v1333, 0.0
      %1401 = vadd.xlane.f32.xlu0 %v1400
      %v1402 = vpop.xlane.xlu0 %1401
      %v1403 = vsel %vm1393, %v1334, 0.0
      %1404 = vadd.xlane.f32.xlu0 %v1403
      %v1405 = vpop.xlane.xlu0 %1404
      %v1406 = vsel %vm1393, %v1335, 0.0
      %1407 = vadd.xlane.f32.xlu0 %v1406
      %v1408 = vpop.xlane.xlu0 %1407
      %v1409 = vsel %vm1393, %v1336, 0.0
      %1410 = vadd.xlane.f32.xlu0 %v1409
      %v1411 = vpop.xlane.xlu0 %1410
      %v1412 = vsel %vm1393, %v1337, 0.0
      %1413 = vadd.xlane.f32.xlu0 %v1412
      %v1414 = vpop.xlane.xlu0 %1413
      %v1415 = vsel %vm1393, %v1338, 0.0
      %1416 = vadd.xlane.f32.xlu0 %v1415
      %v1417 = vpop.xlane.xlu0 %1416
      %v1418 = vsel %vm1393, %v1339, 0.0
      %1419 = vadd.xlane.f32.xlu0 %v1418
      %v1420 = vpop.xlane.xlu0 %1419
      %v1421 = vsel %vm1393, %v1340, 0.0
      %1422 = vadd.xlane.f32.xlu0 %v1421
      %v1423 = vpop.xlane.xlu0 %1422
      %v1424 = vsel %vm1393, %v1341, 0.0
      %1425 = vadd.xlane.f32.xlu0 %v1424
      %v1426 = vpop.xlane.xlu0 %1425
      %v1427 = vsel %vm1393, %v1342, 0.0
      %1428 = vadd.xlane.f32.xlu0 %v1427
      %v1429 = vpop.xlane.xlu0 %1428
      %v1430 = vsel %vm1393, %v1343, 0.0
      %1431 = vadd.xlane.f32.xlu0 %v1430
      %v1432 = vpop.xlane.xlu0 %1431
      %v1433 = vsel %vm1393, %v1344, 0.0
      %1434 = vadd.xlane.f32.xlu0 %v1433
      %v1435 = vpop.xlane.xlu0 %1434
      %v1436 = vsel %vm1393, %v1345, 0.0
      %1437 = vadd.xlane.f32.xlu0 %v1436
      %v1438 = vpop.xlane.xlu0 %1437
      %v1439 = vsel %vm1393, %v1346, 0.0
      %1440 = vadd.xlane.f32.xlu0 %v1439
      %v1441 = vpop.xlane.xlu0 %1440
      %v1442 = vsel %vm1393, %v1377, 0.0
      %1443 = vadd.xlane.f32.xlu0 %v1442
      %v1444 = vpop.xlane.xlu0 %1443
      %v1445 = vsel %vm1393, %v1378, 0.0
      %1446 = vadd.xlane.f32.xlu0 %v1445
      %v1447 = vpop.xlane.xlu0 %1446
      %v1448 = vsel %vm1393, %v1379, 0.0
      %1449 = vadd.xlane.f32.xlu0 %v1448
      %v1450 = vpop.xlane.xlu0 %1449
      %v1451 = vsel %vm1393, %v1380, 0.0
      %1452 = vadd.xlane.f32.xlu0 %v1451
      %v1453 = vpop.xlane.xlu0 %1452
      %v1454 = vsel %vm1393, %v1381, 0.0
      %1455 = vadd.xlane.f32.xlu0 %v1454
      %v1456 = vpop.xlane.xlu0 %1455
      %v1457 = vsel %vm1393, %v1382, 0.0
      %1458 = vadd.xlane.f32.xlu0 %v1457
      %v1459 = vpop.xlane.xlu0 %1458
      %v1460 = vsel %vm1393, %v1383, 0.0
      %1461 = vadd.xlane.f32.xlu0 %v1460
      %v1462 = vpop.xlane.xlu0 %1461
      %v1463 = vsel %vm1393, %v1384, 0.0
      %1464 = vadd.xlane.f32.xlu0 %v1463
      %v1465 = vpop.xlane.xlu0 %1464
      %v1466 = vsel %vm1393, %v1385, 0.0
      %1467 = vadd.xlane.f32.xlu0 %v1466
      %v1468 = vpop.xlane.xlu0 %1467
      %v1469 = vsel %vm1393, %v1386, 0.0
      %1470 = vadd.xlane.f32.xlu0 %v1469
      %v1471 = vpop.xlane.xlu0 %1470
      %v1472 = vsel %vm1393, %v1387, 0.0
      %1473 = vadd.xlane.f32.xlu0 %v1472
      %v1474 = vpop.xlane.xlu0 %1473
      %v1475 = vsel %vm1393, %v1388, 0.0
      %1476 = vadd.xlane.f32.xlu0 %v1475
      %v1477 = vpop.xlane.xlu0 %1476
      %v1478 = vsel %vm1393, %v1389, 0.0
      %1479 = vadd.xlane.f32.xlu0 %v1478
      %v1480 = vpop.xlane.xlu0 %1479
      %v1481 = vsel %vm1393, %v1390, 0.0
      %1482 = vadd.xlane.f32.xlu0 %v1481
      %v1483 = vpop.xlane.xlu0 %1482
      %v1484 = vsel %vm1393, %v1391, 0.0
      %1485 = vadd.xlane.f32.xlu0 %v1484
      %v1486 = vpop.xlane.xlu0 %1485
      %v1487 = vsel %vm1393, %v1392, 0.0
      %1488 = vadd.xlane.f32.xlu0 %v1487
      %v1489 = vpop.xlane.xlu0 %1488
      %v1490 = vmul.f32 %v1377, %v1377
      %v1491 = vmul.f32 %v1378, %v1378
      %v1492 = vmul.f32 %v1379, %v1379
      %v1493 = vmul.f32 %v1380, %v1380
      %v1494 = vmul.f32 %v1381, %v1381
      %v1495 = vmul.f32 %v1382, %v1382
      %v1496 = vmul.f32 %v1383, %v1383
      %v1497 = vmul.f32 %v1384, %v1384
      %v1498 = vmul.f32 %v1385, %v1385
      %v1499 = vmul.f32 %v1386, %v1386
      %v1500 = vmul.f32 %v1387, %v1387
      %v1501 = vmul.f32 %v1388, %v1388
      %v1502 = vmul.f32 %v1389, %v1389
      %v1503 = vmul.f32 %v1390, %v1390
      %v1504 = vmul.f32 %v1391, %v1391
      %v1505 = vmul.f32 %v1392, %v1392
      %v1506 = vsel %vm1393, %v1490, 0.0
      %1507 = vadd.xlane.f32.xlu0 %v1506
      %v1508 = vpop.xlane.xlu0 %1507
      %v1509 = vsel %vm1393, %v1491, 0.0
      %1510 = vadd.xlane.f32.xlu0 %v1509
      %v1511 = vpop.xlane.xlu0 %1510
      %v1512 = vsel %vm1393, %v1492, 0.0
      %1513 = vadd.xlane.f32.xlu0 %v1512
      %v1514 = vpop.xlane.xlu0 %1513
      %v1515 = vsel %vm1393, %v1493, 0.0
      %1516 = vadd.xlane.f32.xlu0 %v1515
      %v1517 = vpop.xlane.xlu0 %1516
      %v1518 = vsel %vm1393, %v1494, 0.0
      %1519 = vadd.xlane.f32.xlu0 %v1518
      %v1520 = vpop.xlane.xlu0 %1519
      %v1521 = vsel %vm1393, %v1495, 0.0
      %1522 = vadd.xlane.f32.xlu0 %v1521
      %v1523 = vpop.xlane.xlu0 %1522
      %v1524 = vsel %vm1393, %v1496, 0.0
      %1525 = vadd.xlane.f32.xlu0 %v1524
      %v1526 = vpop.xlane.xlu0 %1525
      %v1527 = vsel %vm1393, %v1497, 0.0
      %1528 = vadd.xlane.f32.xlu0 %v1527
      %v1529 = vpop.xlane.xlu0 %1528
      %v1530 = vsel %vm1393, %v1498, 0.0
      %1531 = vadd.xlane.f32.xlu0 %v1530
      %v1532 = vpop.xlane.xlu0 %1531
      %v1533 = vsel %vm1393, %v1499, 0.0
      %1534 = vadd.xlane.f32.xlu0 %v1533
      %v1535 = vpop.xlane.xlu0 %1534
      %v1536 = vsel %vm1393, %v1500, 0.0
      %1537 = vadd.xlane.f32.xlu0 %v1536
      %v1538 = vpop.xlane.xlu0 %1537
      %v1539 = vsel %vm1393, %v1501, 0.0
      %1540 = vadd.xlane.f32.xlu0 %v1539
      %v1541 = vpop.xlane.xlu0 %1540
      %v1542 = vsel %vm1393, %v1502, 0.0
      %1543 = vadd.xlane.f32.xlu0 %v1542
      %v1544 = vpop.xlane.xlu0 %1543
      %v1545 = vsel %vm1393, %v1503, 0.0
      %1546 = vadd.xlane.f32.xlu0 %v1545
      %v1547 = vpop.xlane.xlu0 %1546
      %v1548 = vsel %vm1393, %v1504, 0.0
      %1549 = vadd.xlane.f32.xlu0 %v1548
      %v1550 = vpop.xlane.xlu0 %1549
      %v1551 = vsel %vm1393, %v1505, 0.0
      %1552 = vadd.xlane.f32.xlu0 %v1551
      %v1553 = vpop.xlane.xlu0 %1552
      %v1554 = vadd.f32 %v1237, %v1396
      %v1555 = vadd.f32 %v1238, %v1399
      %v1556 = vadd.f32 %v1239, %v1402
      %v1557 = vadd.f32 %v1240, %v1405
      %v1558 = vadd.f32 %v1241, %v1408
      %v1559 = vadd.f32 %v1242, %v1411
      %v1560 = vadd.f32 %v1243, %v1414
      %v1561 = vadd.f32 %v1244, %v1417
      %v1562 = vadd.f32 %v1245, %v1420
      %v1563 = vadd.f32 %v1246, %v1423
      %v1564 = vadd.f32 %v1247, %v1426
      %v1565 = vadd.f32 %v1248, %v1429
      %v1566 = vadd.f32 %v1249, %v1432
      %v1567 = vadd.f32 %v1250, %v1435
      %v1568 = vadd.f32 %v1251, %v1438
      %v1569 = vadd.f32 %v1252, %v1441
      %v1570 = vadd.f32 %v1253, %v1444
      %v1571 = vadd.f32 %v1254, %v1447
      %v1572 = vadd.f32 %v1255, %v1450
      %v1573 = vadd.f32 %v1256, %v1453
      %v1574 = vadd.f32 %v1257, %v1456
      %v1575 = vadd.f32 %v1258, %v1459
      %v1576 = vadd.f32 %v1259, %v1462
      %v1577 = vadd.f32 %v1260, %v1465
      %v1578 = vadd.f32 %v1261, %v1468
      %v1579 = vadd.f32 %v1262, %v1471
      %v1580 = vadd.f32 %v1263, %v1474
      %v1581 = vadd.f32 %v1264, %v1477
      %v1582 = vadd.f32 %v1265, %v1480
      %v1583 = vadd.f32 %v1266, %v1483
      %v1584 = vadd.f32 %v1267, %v1486
      %v1585 = vadd.f32 %v1268, %v1489
      %v1586 = vadd.f32 %v1269, %v1508
      %v1587 = vadd.f32 %v1270, %v1511
      %v1588 = vadd.f32 %v1271, %v1514
      %v1589 = vadd.f32 %v1272, %v1517
      %v1590 = vadd.f32 %v1273, %v1520
      %v1591 = vadd.f32 %v1274, %v1523
      %v1592 = vadd.f32 %v1275, %v1526
      %v1593 = vadd.f32 %v1276, %v1529
      %v1594 = vadd.f32 %v1277, %v1532
      %v1595 = vadd.f32 %v1278, %v1535
      %v1596 = vadd.f32 %v1279, %v1538
      %v1597 = vadd.f32 %v1280, %v1541
      %v1598 = vadd.f32 %v1281, %v1544
      %v1599 = vadd.f32 %v1282, %v1547
      %v1600 = vadd.f32 %v1283, %v1550
      %v1601 = vadd.f32 %v1284, %v1553
      %v1602 = vld [vmem:[%s691] sm:$0xff]
      %v1603 = vld [vmem:[%s691 + $0x8] sm:$0xff]
      %v1604 = vld [vmem:[%s691 + $0x10] sm:$0xff]
      %v1605 = vld [vmem:[%s691 + $0x18] sm:$0xff]
      %v1606 = vld [vmem:[%s691 + $0x20] sm:$0xff]
      %v1607 = vld [vmem:[%s691 + $0x28] sm:$0xff]
      %v1608 = vld [vmem:[%s691 + $0x30] sm:$0xff]
      %v1609 = vld [vmem:[%s691 + $0x38] sm:$0xff]
      %v1610 = vld [vmem:[%s691 + $0x40] sm:$0xff]
      %v1611 = vld [vmem:[%s691 + $0x48] sm:$0xff]
      %v1612 = vld [vmem:[%s691 + $0x50] sm:$0xff]
      %v1613 = vld [vmem:[%s691 + $0x58] sm:$0xff]
      %v1614 = vld [vmem:[%s691 + $0x60] sm:$0xff]
      %v1615 = vld [vmem:[%s691 + $0x68] sm:$0xff]
      %v1616 = vld [vmem:[%s691 + $0x70] sm:$0xff]
      %v1617 = vld [vmem:[%s691 + $0x78] sm:$0xff]
      %v1618 = vld [vmem:[%s7] sm:$0x1]
      %v1620 = vlaneseq
      %v1621 = vshrl.u32 %v1620, 7
      %v1622 = vsub.s32 0, %v1621
      %v1623 = vrot.slane %v1618, %v1622
      %v1625 = vmul.f32 %v1602, %v1623
      %v1626 = vmul.f32 %v1603, %v1623
      %v1627 = vmul.f32 %v1604, %v1623
      %v1628 = vmul.f32 %v1605, %v1623
      %v1629 = vmul.f32 %v1606, %v1623
      %v1630 = vmul.f32 %v1607, %v1623
      %v1631 = vmul.f32 %v1608, %v1623
      %v1632 = vmul.f32 %v1609, %v1623
      %v1633 = vmul.f32 %v1610, %v1623
      %v1634 = vmul.f32 %v1611, %v1623
      %v1635 = vmul.f32 %v1612, %v1623
      %v1636 = vmul.f32 %v1613, %v1623
      %v1637 = vmul.f32 %v1614, %v1623
      %v1638 = vmul.f32 %v1615, %v1623
      %v1639 = vmul.f32 %v1616, %v1623
      %v1640 = vmul.f32 %v1617, %v1623
      %v1641 = vld [vmem:[%s11] sm:$0x1]
      %v1643 = vlaneseq
      %v1644 = vshrl.u32 %v1643, 7
      %v1645 = vsub.s32 0, %v1644
      %v1646 = vrot.slane %v1641, %v1645
      %v1648 = vadd.f32 %v1625, %v1646
      %v1649 = vadd.f32 %v1626, %v1646
      %v1650 = vadd.f32 %v1627, %v1646
      %v1651 = vadd.f32 %v1628, %v1646
      %v1652 = vadd.f32 %v1629, %v1646
      %v1653 = vadd.f32 %v1630, %v1646
      %v1654 = vadd.f32 %v1631, %v1646
      %v1655 = vadd.f32 %v1632, %v1646
      %v1656 = vadd.f32 %v1633, %v1646
      %v1657 = vadd.f32 %v1634, %v1646
      %v1658 = vadd.f32 %v1635, %v1646
      %v1659 = vadd.f32 %v1636, %v1646
      %v1660 = vadd.f32 %v1637, %v1646
      %v1661 = vadd.f32 %v1638, %v1646
      %v1662 = vadd.f32 %v1639, %v1646
      %v1663 = vadd.f32 %v1640, %v1646
      %v1664 = vld [vmem:[%s15] sm:$0x1]
      %v1666 = vlaneseq
      %v1667 = vshrl.u32 %v1666, 7
      %v1668 = vsub.s32 0, %v1667
      %v1669 = vrot.slane %v1664, %v1668
      %v1671 = vmul.f32 %v1602, %v1669
      %v1672 = vmul.f32 %v1603, %v1669
      %v1673 = vmul.f32 %v1604, %v1669
      %v1674 = vmul.f32 %v1605, %v1669
      %v1675 = vmul.f32 %v1606, %v1669
      %v1676 = vmul.f32 %v1607, %v1669
      %v1677 = vmul.f32 %v1608, %v1669
      %v1678 = vmul.f32 %v1609, %v1669
      %v1679 = vmul.f32 %v1610, %v1669
      %v1680 = vmul.f32 %v1611, %v1669
      %v1681 = vmul.f32 %v1612, %v1669
      %v1682 = vmul.f32 %v1613, %v1669
      %v1683 = vmul.f32 %v1614, %v1669
      %v1684 = vmul.f32 %v1615, %v1669
      %v1685 = vmul.f32 %v1616, %v1669
      %v1686 = vmul.f32 %v1617, %v1669
      %v1687 = vld [vmem:[%s19] sm:$0x1]
      %v1689 = vlaneseq
      %v1690 = vshrl.u32 %v1689, 7
      %v1691 = vsub.s32 0, %v1690
      %v1692 = vrot.slane %v1687, %v1691
      %v1694 = vadd.f32 %v1671, %v1692
      %v1695 = vadd.f32 %v1672, %v1692
      %v1696 = vadd.f32 %v1673, %v1692
      %v1697 = vadd.f32 %v1674, %v1692
      %v1698 = vadd.f32 %v1675, %v1692
      %v1699 = vadd.f32 %v1676, %v1692
      %v1700 = vadd.f32 %v1677, %v1692
      %v1701 = vadd.f32 %v1678, %v1692
      %v1702 = vadd.f32 %v1679, %v1692
      %v1703 = vadd.f32 %v1680, %v1692
      %v1704 = vadd.f32 %v1681, %v1692
      %v1705 = vadd.f32 %v1682, %v1692
      %v1706 = vadd.f32 %v1683, %v1692
      %v1707 = vadd.f32 %v1684, %v1692
      %v1708 = vadd.f32 %v1685, %v1692
      %v1709 = vadd.f32 %v1686, %v1692
      %v1710 = vsel %vm1393, %v1648, 0.0
      %1711 = vadd.xlane.f32.xlu0 %v1710
      %v1712 = vpop.xlane.xlu0 %1711
      %v1713 = vsel %vm1393, %v1649, 0.0
      %1714 = vadd.xlane.f32.xlu0 %v1713
      %v1715 = vpop.xlane.xlu0 %1714
      %v1716 = vsel %vm1393, %v1650, 0.0
      %1717 = vadd.xlane.f32.xlu0 %v1716
      %v1718 = vpop.xlane.xlu0 %1717
      %v1719 = vsel %vm1393, %v1651, 0.0
      %1720 = vadd.xlane.f32.xlu0 %v1719
      %v1721 = vpop.xlane.xlu0 %1720
      %v1722 = vsel %vm1393, %v1652, 0.0
      %1723 = vadd.xlane.f32.xlu0 %v1722
      %v1724 = vpop.xlane.xlu0 %1723
      %v1725 = vsel %vm1393, %v1653, 0.0
      %1726 = vadd.xlane.f32.xlu0 %v1725
      %v1727 = vpop.xlane.xlu0 %1726
      %v1728 = vsel %vm1393, %v1654, 0.0
      %1729 = vadd.xlane.f32.xlu0 %v1728
      %v1730 = vpop.xlane.xlu0 %1729
      %v1731 = vsel %vm1393, %v1655, 0.0
      %1732 = vadd.xlane.f32.xlu0 %v1731
      %v1733 = vpop.xlane.xlu0 %1732
      %v1734 = vsel %vm1393, %v1656, 0.0
      %1735 = vadd.xlane.f32.xlu0 %v1734
      %v1736 = vpop.xlane.xlu0 %1735
      %v1737 = vsel %vm1393, %v1657, 0.0
      %1738 = vadd.xlane.f32.xlu0 %v1737
      %v1739 = vpop.xlane.xlu0 %1738
      %v1740 = vsel %vm1393, %v1658, 0.0
      %1741 = vadd.xlane.f32.xlu0 %v1740
      %v1742 = vpop.xlane.xlu0 %1741
      %v1743 = vsel %vm1393, %v1659, 0.0
      %1744 = vadd.xlane.f32.xlu0 %v1743
      %v1745 = vpop.xlane.xlu0 %1744
      %v1746 = vsel %vm1393, %v1660, 0.0
      %1747 = vadd.xlane.f32.xlu0 %v1746
      %v1748 = vpop.xlane.xlu0 %1747
      %v1749 = vsel %vm1393, %v1661, 0.0
      %1750 = vadd.xlane.f32.xlu0 %v1749
      %v1751 = vpop.xlane.xlu0 %1750
      %v1752 = vsel %vm1393, %v1662, 0.0
      %1753 = vadd.xlane.f32.xlu0 %v1752
      %v1754 = vpop.xlane.xlu0 %1753
      %v1755 = vsel %vm1393, %v1663, 0.0
      %1756 = vadd.xlane.f32.xlu0 %v1755
      %v1757 = vpop.xlane.xlu0 %1756
      %v1758 = vsel %vm1393, %v1694, 0.0
      %1759 = vadd.xlane.f32.xlu0 %v1758
      %v1760 = vpop.xlane.xlu0 %1759
      %v1761 = vsel %vm1393, %v1695, 0.0
      %1762 = vadd.xlane.f32.xlu0 %v1761
      %v1763 = vpop.xlane.xlu0 %1762
      %v1764 = vsel %vm1393, %v1696, 0.0
      %1765 = vadd.xlane.f32.xlu0 %v1764
      %v1766 = vpop.xlane.xlu0 %1765
      %v1767 = vsel %vm1393, %v1697, 0.0
      %1768 = vadd.xlane.f32.xlu0 %v1767
      %v1769 = vpop.xlane.xlu0 %1768
      %v1770 = vsel %vm1393, %v1698, 0.0
      %1771 = vadd.xlane.f32.xlu0 %v1770
      %v1772 = vpop.xlane.xlu0 %1771
      %v1773 = vsel %vm1393, %v1699, 0.0
      %1774 = vadd.xlane.f32.xlu0 %v1773
      %v1775 = vpop.xlane.xlu0 %1774
      %v1776 = vsel %vm1393, %v1700, 0.0
      %1777 = vadd.xlane.f32.xlu0 %v1776
      %v1778 = vpop.xlane.xlu0 %1777
      %v1779 = vsel %vm1393, %v1701, 0.0
      %1780 = vadd.xlane.f32.xlu0 %v1779
      %v1781 = vpop.xlane.xlu0 %1780
      %v1782 = vsel %vm1393, %v1702, 0.0
      %1783 = vadd.xlane.f32.xlu0 %v1782
      %v1784 = vpop.xlane.xlu0 %1783
      %v1785 = vsel %vm1393, %v1703, 0.0
      %1786 = vadd.xlane.f32.xlu0 %v1785
      %v1787 = vpop.xlane.xlu0 %1786
      %v1788 = vsel %vm1393, %v1704, 0.0
      %1789 = vadd.xlane.f32.xlu0 %v1788
      %v1790 = vpop.xlane.xlu0 %1789
      %v1791 = vsel %vm1393, %v1705, 0.0
      %1792 = vadd.xlane.f32.xlu0 %v1791
      %v1793 = vpop.xlane.xlu0 %1792
      %v1794 = vsel %vm1393, %v1706, 0.0
      %1795 = vadd.xlane.f32.xlu0 %v1794
      %v1796 = vpop.xlane.xlu0 %1795
      %v1797 = vsel %vm1393, %v1707, 0.0
      %1798 = vadd.xlane.f32.xlu0 %v1797
      %v1799 = vpop.xlane.xlu0 %1798
      %v1800 = vsel %vm1393, %v1708, 0.0
      %1801 = vadd.xlane.f32.xlu0 %v1800
      %v1802 = vpop.xlane.xlu0 %1801
      %v1803 = vsel %vm1393, %v1709, 0.0
      %1804 = vadd.xlane.f32.xlu0 %v1803
      %v1805 = vpop.xlane.xlu0 %1804
      %v1806 = vmul.f32 %v1694, %v1694
      %v1807 = vmul.f32 %v1695, %v1695
      %v1808 = vmul.f32 %v1696, %v1696
      %v1809 = vmul.f32 %v1697, %v1697
      %v1810 = vmul.f32 %v1698, %v1698
      %v1811 = vmul.f32 %v1699, %v1699
      %v1812 = vmul.f32 %v1700, %v1700
      %v1813 = vmul.f32 %v1701, %v1701
      %v1814 = vmul.f32 %v1702, %v1702
      %v1815 = vmul.f32 %v1703, %v1703
      %v1816 = vmul.f32 %v1704, %v1704
      %v1817 = vmul.f32 %v1705, %v1705
      %v1818 = vmul.f32 %v1706, %v1706
      %v1819 = vmul.f32 %v1707, %v1707
      %v1820 = vmul.f32 %v1708, %v1708
      %v1821 = vmul.f32 %v1709, %v1709
      %v1822 = vsel %vm1393, %v1806, 0.0
      %1823 = vadd.xlane.f32.xlu0 %v1822
      %v1824 = vpop.xlane.xlu0 %1823
      %v1825 = vsel %vm1393, %v1807, 0.0
      %1826 = vadd.xlane.f32.xlu0 %v1825
      %v1827 = vpop.xlane.xlu0 %1826
      %v1828 = vsel %vm1393, %v1808, 0.0
      %1829 = vadd.xlane.f32.xlu0 %v1828
      %v1830 = vpop.xlane.xlu0 %1829
      %v1831 = vsel %vm1393, %v1809, 0.0
      %1832 = vadd.xlane.f32.xlu0 %v1831
      %v1833 = vpop.xlane.xlu0 %1832
      %v1834 = vsel %vm1393, %v1810, 0.0
      %1835 = vadd.xlane.f32.xlu0 %v1834
      %v1836 = vpop.xlane.xlu0 %1835
      %v1837 = vsel %vm1393, %v1811, 0.0
      %1838 = vadd.xlane.f32.xlu0 %v1837
      %v1839 = vpop.xlane.xlu0 %1838
      %v1840 = vsel %vm1393, %v1812, 0.0
      %1841 = vadd.xlane.f32.xlu0 %v1840
      %v1842 = vpop.xlane.xlu0 %1841
      %v1843 = vsel %vm1393, %v1813, 0.0
      %1844 = vadd.xlane.f32.xlu0 %v1843
      %v1845 = vpop.xlane.xlu0 %1844
      %v1846 = vsel %vm1393, %v1814, 0.0
      %1847 = vadd.xlane.f32.xlu0 %v1846
      %v1848 = vpop.xlane.xlu0 %1847
      %v1849 = vsel %vm1393, %v1815, 0.0
      %1850 = vadd.xlane.f32.xlu0 %v1849
      %v1851 = vpop.xlane.xlu0 %1850
      %v1852 = vsel %vm1393, %v1816, 0.0
      %1853 = vadd.xlane.f32.xlu0 %v1852
      %v1854 = vpop.xlane.xlu0 %1853
      %v1855 = vsel %vm1393, %v1817, 0.0
      %1856 = vadd.xlane.f32.xlu0 %v1855
      %v1857 = vpop.xlane.xlu0 %1856
      %v1858 = vsel %vm1393, %v1818, 0.0
      %1859 = vadd.xlane.f32.xlu0 %v1858
      %v1860 = vpop.xlane.xlu0 %1859
      %v1861 = vsel %vm1393, %v1819, 0.0
      %1862 = vadd.xlane.f32.xlu0 %v1861
      %v1863 = vpop.xlane.xlu0 %1862
      %v1864 = vsel %vm1393, %v1820, 0.0
      %1865 = vadd.xlane.f32.xlu0 %v1864
      %v1866 = vpop.xlane.xlu0 %1865
      %v1867 = vsel %vm1393, %v1821, 0.0
      %1868 = vadd.xlane.f32.xlu0 %v1867
      %v1869 = vpop.xlane.xlu0 %1868
      %v1870 = vadd.f32 %v1554, %v1712
      %v1871 = vadd.f32 %v1555, %v1715
      %v1872 = vadd.f32 %v1556, %v1718
      %v1873 = vadd.f32 %v1557, %v1721
      %v1874 = vadd.f32 %v1558, %v1724
      %v1875 = vadd.f32 %v1559, %v1727
      %v1876 = vadd.f32 %v1560, %v1730
      %v1877 = vadd.f32 %v1561, %v1733
      %v1878 = vadd.f32 %v1562, %v1736
      %v1879 = vadd.f32 %v1563, %v1739
      %v1880 = vadd.f32 %v1564, %v1742
      %v1881 = vadd.f32 %v1565, %v1745
      %v1882 = vadd.f32 %v1566, %v1748
      %v1883 = vadd.f32 %v1567, %v1751
      %v1884 = vadd.f32 %v1568, %v1754
      %v1885 = vadd.f32 %v1569, %v1757
      %v1886 = vadd.f32 %v1570, %v1760
      %v1887 = vadd.f32 %v1571, %v1763
      %v1888 = vadd.f32 %v1572, %v1766
      %v1889 = vadd.f32 %v1573, %v1769
      %v1890 = vadd.f32 %v1574, %v1772
      %v1891 = vadd.f32 %v1575, %v1775
      %v1892 = vadd.f32 %v1576, %v1778
      %v1893 = vadd.f32 %v1577, %v1781
      %v1894 = vadd.f32 %v1578, %v1784
      %v1895 = vadd.f32 %v1579, %v1787
      %v1896 = vadd.f32 %v1580, %v1790
      %v1897 = vadd.f32 %v1581, %v1793
      %v1898 = vadd.f32 %v1582, %v1796
      %v1899 = vadd.f32 %v1583, %v1799
      %v1900 = vadd.f32 %v1584, %v1802
      %v1901 = vadd.f32 %v1585, %v1805
      %v1902 = vadd.f32 %v1586, %v1824
      %v1903 = vadd.f32 %v1587, %v1827
      %v1904 = vadd.f32 %v1588, %v1830
      %v1905 = vadd.f32 %v1589, %v1833
      %v1906 = vadd.f32 %v1590, %v1836
      %v1907 = vadd.f32 %v1591, %v1839
      %v1908 = vadd.f32 %v1592, %v1842
      %v1909 = vadd.f32 %v1593, %v1845
      %v1910 = vadd.f32 %v1594, %v1848
      %v1911 = vadd.f32 %v1595, %v1851
      %v1912 = vadd.f32 %v1596, %v1854
      %v1913 = vadd.f32 %v1597, %v1857
      %v1914 = vadd.f32 %v1598, %v1860
      %v1915 = vadd.f32 %v1599, %v1863
      %v1916 = vadd.f32 %v1600, %v1866
      %v1917 = vadd.f32 %v1601, %v1869
      %v1918 = vmul.f32 %v1886, %v1886
      %v1919 = vmul.f32 %v1887, %v1887
      %v1920 = vmul.f32 %v1888, %v1888
      %v1921 = vmul.f32 %v1889, %v1889
      %v1922 = vmul.f32 %v1890, %v1890
      %v1923 = vmul.f32 %v1891, %v1891
      %v1924 = vmul.f32 %v1892, %v1892
      %v1925 = vmul.f32 %v1893, %v1893
      %v1926 = vmul.f32 %v1894, %v1894
      %v1927 = vmul.f32 %v1895, %v1895
      %v1928 = vmul.f32 %v1896, %v1896
      %v1929 = vmul.f32 %v1897, %v1897
      %v1930 = vmul.f32 %v1898, %v1898
      %v1931 = vmul.f32 %v1899, %v1899
      %v1932 = vmul.f32 %v1900, %v1900
      %v1933 = vmul.f32 %v1901, %v1901
      %v1934 = vsub.f32 %v1918, %v1902
      %v1935 = vsub.f32 %v1919, %v1903
      %v1936 = vsub.f32 %v1920, %v1904
      %v1937 = vsub.f32 %v1921, %v1905
      %v1938 = vsub.f32 %v1922, %v1906
      %v1939 = vsub.f32 %v1923, %v1907
      %v1940 = vsub.f32 %v1924, %v1908
      %v1941 = vsub.f32 %v1925, %v1909
      %v1942 = vsub.f32 %v1926, %v1910
      %v1943 = vsub.f32 %v1927, %v1911
      %v1944 = vsub.f32 %v1928, %v1912
      %v1945 = vsub.f32 %v1929, %v1913
      %v1946 = vsub.f32 %v1930, %v1914
      %v1947 = vsub.f32 %v1931, %v1915
      %v1948 = vsub.f32 %v1932, %v1916
      %v1949 = vsub.f32 %v1933, %v1917
      %v1950 = vmul.f32 %v1934, 0.5
      %v1951 = vmul.f32 %v1935, 0.5
      %v1952 = vmul.f32 %v1936, 0.5
      %v1953 = vmul.f32 %v1937, 0.5
      %v1954 = vmul.f32 %v1938, 0.5
      %v1955 = vmul.f32 %v1939, 0.5
      %v1956 = vmul.f32 %v1940, 0.5
      %v1957 = vmul.f32 %v1941, 0.5
      %v1958 = vmul.f32 %v1942, 0.5
      %v1959 = vmul.f32 %v1943, 0.5
      %v1960 = vmul.f32 %v1944, 0.5
      %v1961 = vmul.f32 %v1945, 0.5
      %v1962 = vmul.f32 %v1946, 0.5
      %v1963 = vmul.f32 %v1947, 0.5
      %v1964 = vmul.f32 %v1948, 0.5
      %v1965 = vmul.f32 %v1949, 0.5
      %v1966 = vadd.f32 %v1870, %v1950
      %v1967 = vadd.f32 %v1871, %v1951
      %v1968 = vadd.f32 %v1872, %v1952
      %v1969 = vadd.f32 %v1873, %v1953
      %v1970 = vadd.f32 %v1874, %v1954
      %v1971 = vadd.f32 %v1875, %v1955
      %v1972 = vadd.f32 %v1876, %v1956
      %v1973 = vadd.f32 %v1877, %v1957
      %v1974 = vadd.f32 %v1878, %v1958
      %v1975 = vadd.f32 %v1879, %v1959
      %v1976 = vadd.f32 %v1880, %v1960
      %v1977 = vadd.f32 %v1881, %v1961
      %v1978 = vadd.f32 %v1882, %v1962
      %v1979 = vadd.f32 %v1883, %v1963
      %v1980 = vadd.f32 %v1884, %v1964
      %v1981 = vadd.f32 %v1885, %v1965
      %vm1982 = vcmask 7168
      %1983 = vst.msk [vmem:[%s697] sm:$0xff] %vm1982, %v1966
      %1984 = vst.msk [vmem:[%s697 + $0x8] sm:$0xff] %vm1982, %v1967
      %1985 = vst.msk [vmem:[%s697 + $0x10] sm:$0xff] %vm1982, %v1968
      %1986 = vst.msk [vmem:[%s697 + $0x18] sm:$0xff] %vm1982, %v1969
      %1987 = vst.msk [vmem:[%s697 + $0x20] sm:$0xff] %vm1982, %v1970
      %1988 = vst.msk [vmem:[%s697 + $0x28] sm:$0xff] %vm1982, %v1971
      %1989 = vst.msk [vmem:[%s697 + $0x30] sm:$0xff] %vm1982, %v1972
      %1990 = vst.msk [vmem:[%s697 + $0x38] sm:$0xff] %vm1982, %v1973
      %1991 = vst.msk [vmem:[%s697 + $0x40] sm:$0xff] %vm1982, %v1974
      %1992 = vst.msk [vmem:[%s697 + $0x48] sm:$0xff] %vm1982, %v1975
      %1993 = vst.msk [vmem:[%s697 + $0x50] sm:$0xff] %vm1982, %v1976
      %1994 = vst.msk [vmem:[%s697 + $0x58] sm:$0xff] %vm1982, %v1977
      %1995 = vst.msk [vmem:[%s697 + $0x60] sm:$0xff] %vm1982, %v1978
      %1996 = vst.msk [vmem:[%s697 + $0x68] sm:$0xff] %vm1982, %v1979
      %1997 = vst.msk [vmem:[%s697 + $0x70] sm:$0xff] %vm1982, %v1980
      %1998 = vst.msk [vmem:[%s697 + $0x78] sm:$0xff] %vm1982, %v1981
      %s1999 = smul.u32 16, %s31
      %p2000 = scmp.lt.s32.totalorder %s1999, 31
      %s2001 = scalar_select %p2000, %s1999, 31
      %s2002 = smul.addr %s2001, 8
      %s2003 = scalar_lea.vmem %s20, %s2002
      // Predicated region
      $region101: #{_fm_block_dense.1} parent=99 // pred_check
        %p2004 = pneg %p489
      $region102: #{_fm_block_dense.1} parent=99 // pred_check_branch
        %2006 = sbr.rel (%p2004) target = $region104
      $region103: #{_fm_block_dense.1} parent=99 // pred_region
        %s2007 = smul.u32 16, %s31
      $region104: #{_fm_block_dense.1} parent=99 // pred_fallthru
        _
    $region100: #{_fm_block_dense.1} parent=5 // pred_fallthru
      _
    %p2008 = scmp.le.s32.totalorder 2, %s26
    // Predicated region
    $region105: #{_fm_block_dense.1} parent=5 // pred_check
      %p2009 = pneg %p2008
    $region106: #{_fm_block_dense.1} parent=5 // pred_check_branch
      %2011 = sbr.rel (%p2009) target = $region108
    $region107: #{_fm_block_dense.1} parent=5 // pred_region
      %s2012 = ssub.s32 %s26, 2
      // Predicated region
      $region109: #{_fm_block_dense.1} parent=107 // pred_check
        %p2013 = pneg %p495
      $region110: #{_fm_block_dense.1} parent=107 // pred_check_branch
        %2015 = sbr.rel (%p2013) target = $region112
      $region111: #{_fm_block_dense.1} parent=107 // pred_region
        %s2016 = smul.u32 16, %s32
        %p2017 = scmp.lt.s32.totalorder %s2016, 31
        %s2018 = scalar_select %p2017, %s2016, 31
        %s2019 = smul.addr %s2018, 8
        %s2020 = scalar_lea.vmem %s20, %s2019
      $region112: #{_fm_block_dense.1} parent=107 // pred_fallthru
        _
    $region108: #{_fm_block_dense.1} parent=5 // pred_fallthru
      _
  $region6: #{_fm_block_dense.1} parent=0 // loop_footer
    %s30 = sadd.s32 1, %s26
  $region7: #{_fm_block_dense.1} parent=0 // loop_footer_branch
    %25 = sbr.rel target = $region3
  $region8: #{_fm_block_dense.1} parent=0 // loop_exit
    _

</llo_original>
